<compile_context>
chip_gen: v7x
topology: tpu7x:2x2x1
jax: 0.10.0
libtpu: 0.0.40
codegen_flags: <defaults>
</compile_context>

<pallas_src>
import jax
import jax.numpy as jnp
from jax import lax
from jax.experimental import pallas as pl
from jax.experimental.pallas import tpu as pltpu


def lstm_kernel(tok_ref,                       # (T*B, 1) int32, time-major flattened tokens
                emb_ref,                       # (V, E)   f32 embedding table
                wih0_ref, whh0_ref, b0_ref,    # (E,4H) (H,4H) (1,4H)  gate order [i,f,o,g]
                wih1_ref, whh1_ref, b1_ref,    # (H,4H) (H,4H) (1,4H)
                wfc_ref, bfc_ref,              # (H,O)  (1,O)
                out_ref,                       # (B, O)
                xg_ref):                       # VMEM scratch (T*B, 4H) f32
    TB = tok_ref.shape[0]
    V = emb_ref.shape[0]
    H = whh0_ref.shape[0]
    B = out_ref.shape[0]
    T = TB // B
    H3 = 3 * H
    H4 = 4 * H

    # ---- Phase 1 (off the recurrence chain): embedding + layer-0 input
    # projection for ALL timesteps as two batched MXU matmuls.
    # one-hot(tok) @ (Emb @ Wih0) selects exact embedding rows (0*x + 1*y is
    # exact in f32), so this is numerically identical to gather-then-matmul.
    onehot = (tok_ref[...] ==
              lax.broadcasted_iota(jnp.int32, (TB, V), 1)).astype(jnp.float32)
    emb_proj = jnp.dot(emb_ref[...], wih0_ref[...],
                       preferred_element_type=jnp.float32)            # (V, 4H)
    xg_ref[...] = (jnp.dot(onehot, emb_proj,
                           preferred_element_type=jnp.float32)
                   + b0_ref[...])                                      # (T*B, 4H)

    # ---- Phase 2: recurrence. Weights loaded once; states carried in vregs.
    whh0 = whh0_ref[...]
    wih1 = wih1_ref[...]
    whh1 = whh1_ref[...]
    b1b = jnp.broadcast_to(b1_ref[...], (B, H4))   # broadcast hoisted out of loop

    def gates_to_state(gates, c_prev):
        # gate order [i, f, o, g]: one sigmoid over 3H lanes + one tanh over H.
        sig = jax.nn.sigmoid(gates[:, :H3])
        i_g = sig[:, 0:H]
        f_g = sig[:, H:2 * H]
        o_g = sig[:, 2 * H:H3]
        g_g = jnp.tanh(gates[:, H3:])
        c_new = f_g * c_prev + i_g * g_g
        h_new = o_g * jnp.tanh(c_new)
        return h_new, c_new

    h0 = c0 = h1 = c1 = jnp.zeros((B, H), jnp.float32)
    # T is a static Python int -> fully unrolled straight-line code with
    # static slice offsets; the LLO scheduler interleaves the independent
    # layer-1(t) and layer-0(t+1) work.
    for t in range(T):
        xg_t = xg_ref[pl.ds(t * B, B), :]                      # static slice
        # Layer 0: only h0 @ Whh0 remains on the serial chain.
        g0 = xg_t + jnp.dot(h0, whh0, preferred_element_type=jnp.float32)
        h0, c0 = gates_to_state(g0, c0)
        # Layer 1.
        g1 = (jnp.dot(h0, wih1, preferred_element_type=jnp.float32)
              + jnp.dot(h1, whh1, preferred_element_type=jnp.float32)
              + b1b)
        h1, c1 = gates_to_state(g1, c1)

    # ---- Phase 3: fc on the last timestep's layer-1 hidden state.
    out_ref[...] = (jnp.dot(h1, wfc_ref[...],
                            preferred_element_type=jnp.float32)
                    + bfc_ref[...]).astype(out_ref.dtype)


def lstm_model_forward(tokens, params):
    """tokens: int32 (B, T).  Returns (B, output_dim) float32."""
    B, T = tokens.shape
    # time-major, flattened so row index = t*B + b (matches kernel slicing).
    tok_tm = jnp.transpose(tokens, (1, 0)).reshape(T * B, 1).astype(jnp.int32)

    H = params["whh0"].shape[0]
    O = params["wfc"].shape[1]

    vmem = pl.BlockSpec(memory_space=pltpu.MemorySpace.VMEM)
    # Tiny problem: everything fits in VMEM in a single invocation.
    # For production sizes: add a batch grid axis with
    # dimension_semantics=("parallel",), stream tokens over T chunks via a
    # BlockSpec, set vmem_limit_bytes, and use bf16 weights on v6e/v7x.
    out = pl.pallas_call(
        lstm_kernel,
        out_shape=jax.ShapeDtypeStruct((B, O), jnp.float32),
        in_specs=[vmem] * 10,
        out_specs=vmem,
        scratch_shapes=[pltpu.VMEM((T * B, 4 * H), jnp.float32)],
    )(tok_tm,
      params["embedding"],
      params["wih0"], params["whh0"], params["b0"],
      params["wih1"], params["whh1"], params["b1"],
      params["wfc"], params["bfc"])
    return out


# ---------------- parameter packing (PyTorch layout -> kernel layout) -------

def _repack_ifog(w_4h_in):
    """PyTorch (4H, in_features), gate order [i,f,g,o] ->
       kernel (in_features, 4H), gate order [i,f,o,g]."""
    i_, f_, g_, o_ = jnp.split(w_4h_in, 4, axis=0)
    return jnp.concatenate([i_, f_, o_, g_], axis=0).T


def pack_params(pt):
    """Convert PyTorch-layout tensors to the kernel layout.

    pt keys: embedding (V,E); per layer l: w_ih_l (4H,in), w_hh_l (4H,H),
    b_ih_l (4H,), b_hh_l (4H,); fc_w (O,H), fc_b (O,).
    """
    def bias(l):
        b = pt[f"b_ih_{l}"] + pt[f"b_hh_{l}"]             # fold the two biases
        return _repack_ifog(b[:, None]).reshape(1, -1)    # (1, 4H), [i,f,o,g]

    return {
        "embedding": pt["embedding"],
        "wih0": _repack_ifog(pt["w_ih_0"]),
        "whh0": _repack_ifog(pt["w_hh_0"]),
        "b0": bias(0),
        "wih1": _repack_ifog(pt["w_ih_1"]),
        "whh1": _repack_ifog(pt["w_hh_1"]),
        "b1": bias(1),
        "wfc": pt["fc_w"].T,
        "bfc": pt["fc_b"][None, :],
    }


def init_params(key, input_dim, embed_dim, hidden_dim, output_dim):
    H = hidden_dim
    bound = 1.0 / jnp.sqrt(jnp.float32(H))
    ks = jax.random.split(key, 12)

    def u(k, shape):
        return jax.random.uniform(k, shape, jnp.float32, -bound, bound)

    # PyTorch-layout random init, then pack to kernel layout.
    pt = {
        "embedding": jax.random.normal(ks[0], (input_dim, embed_dim), jnp.float32),
        "w_ih_0": u(ks[1], (4 * H, embed_dim)),
        "w_hh_0": u(ks[2], (4 * H, H)),
        "b_ih_0": u(ks[3], (4 * H,)),
        "b_hh_0": u(ks[4], (4 * H,)),
        "w_ih_1": u(ks[5], (4 * H, H)),
        "w_hh_1": u(ks[6], (4 * H, H)),
        "b_ih_1": u(ks[7], (4 * H,)),
        "b_hh_1": u(ks[8], (4 * H,)),
        "fc_w": u(ks[9], (output_dim, H)),
        "fc_b": u(ks[10], (output_dim,)),
    }
    return pack_params(pt)


if __name__ == "__main__":
    # Small, deterministic shapes consistent with the module's forward:
    # tokens (B=2, T=8) in [0, vocab=32); embed=16, hidden=32, output=8.
    input_dim, embed_dim, hidden_dim, output_dim = 32, 16, 32, 8
    B, T = 2, 8

    key = jax.random.PRNGKey(0)
    k_tok, k_par = jax.random.split(key)
    tokens = jax.random.randint(k_tok, (B, T), 0, input_dim, dtype=jnp.int32)
    params = init_params(k_par, input_dim, embed_dim, hidden_dim, output_dim)

    out = lstm_model_forward(tokens, params)
    jax.block_until_ready(out)
    assert out.shape == (B, output_dim)
    print("KERNEL_OK")
</pallas_src>

<mosaic_0001>
module attributes {stable_mosaic.version = 11 : i64} {
  func.func @lstm_kernel(%arg0: memref<16x1xi32, #tpu.memory_space<vmem>>, %arg1: memref<32x16xf32, #tpu.memory_space<vmem>>, %arg2: memref<16x128xf32, #tpu.memory_space<vmem>>, %arg3: memref<32x128xf32, #tpu.memory_space<vmem>>, %arg4: memref<1x128xf32, #tpu.memory_space<vmem>>, %arg5: memref<32x128xf32, #tpu.memory_space<vmem>>, %arg6: memref<32x128xf32, #tpu.memory_space<vmem>>, %arg7: memref<1x128xf32, #tpu.memory_space<vmem>>, %arg8: memref<32x8xf32, #tpu.memory_space<vmem>>, %arg9: memref<1x8xf32, #tpu.memory_space<vmem>>, %arg10: memref<2x8xf32, #tpu.memory_space<vmem>>, %arg11: memref<16x128xf32, #tpu.memory_space<vmem>>) attributes {dimension_semantics = [], scalar_prefetch = 0 : i64, scratch_operands = 1 : i64, tpu.core_type = #tpu.core_type<tc>} {
    %c0 = arith.constant 0 : index
    %c0_0 = arith.constant 0 : index
    %0 = vector.load %arg0[%c0, %c0_0] : memref<16x1xi32, #tpu.memory_space<vmem>>, vector<16x1xi32>
    %1 = tpu.iota {dimensions = array<i32: 1>} : vector<16x32xi32>
    %2 = vector.broadcast %0 : vector<16x1xi32> to vector<16x32xi32>
    %3 = arith.cmpi eq, %2, %1 : vector<16x32xi32>
    %4 = arith.extui %3 : vector<16x32xi1> to vector<16x32xi32>
    %5 = arith.sitofp %4 : vector<16x32xi32> to vector<16x32xf32>
    %c0_1 = arith.constant 0 : index
    %c0_2 = arith.constant 0 : index
    %6 = vector.load %arg1[%c0_1, %c0_2] : memref<32x16xf32, #tpu.memory_space<vmem>>, vector<32x16xf32>
    %c0_3 = arith.constant 0 : index
    %c0_4 = arith.constant 0 : index
    %7 = vector.load %arg2[%c0_3, %c0_4] : memref<16x128xf32, #tpu.memory_space<vmem>>, vector<16x128xf32>
    %cst = arith.constant dense<0.000000e+00> : vector<32x128xf32>
    %8 = tpu.matmul %6, %7, %cst {dimension_numbers = #tpu.dot_dimension_numbers<[1], [0], [0], [1], [0, 0, 1, 1], [], []>} : vector<32x16xf32>, vector<16x128xf32>, vector<32x128xf32> -> vector<32x128xf32>
    %cst_5 = arith.constant dense<0.000000e+00> : vector<16x128xf32>
    %9 = tpu.matmul %5, %8, %cst_5 {dimension_numbers = #tpu.dot_dimension_numbers<[1], [0], [0], [1], [0, 0, 1, 1], [], []>} : vector<16x32xf32>, vector<32x128xf32>, vector<16x128xf32> -> vector<16x128xf32>
    %c0_6 = arith.constant 0 : index
    %c0_7 = arith.constant 0 : index
    %10 = vector.load %arg4[%c0_6, %c0_7] : memref<1x128xf32, #tpu.memory_space<vmem>>, vector<1x128xf32>
    %11 = vector.broadcast %10 : vector<1x128xf32> to vector<16x128xf32>
    %12 = arith.addf %9, %11 : vector<16x128xf32>
    %c0_8 = arith.constant 0 : index
    %c0_9 = arith.constant 0 : index
    %13 = vector.load %arg11[%c0_8, %c0_9] : memref<16x128xf32, #tpu.memory_space<vmem>>, vector<16x128xf32>
    tpu.vector_store %arg11[%c0_8, %c0_9], %12 {strides = array<i32>} : memref<16x128xf32, #tpu.memory_space<vmem>>, vector<16x128xf32>,
    %c0_10 = arith.constant 0 : index
    %c0_11 = arith.constant 0 : index
    %14 = vector.load %arg3[%c0_10, %c0_11] : memref<32x128xf32, #tpu.memory_space<vmem>>, vector<32x128xf32>
    %c0_12 = arith.constant 0 : index
    %c0_13 = arith.constant 0 : index
    %15 = vector.load %arg5[%c0_12, %c0_13] : memref<32x128xf32, #tpu.memory_space<vmem>>, vector<32x128xf32>
    %c0_14 = arith.constant 0 : index
    %c0_15 = arith.constant 0 : index
    %16 = vector.load %arg6[%c0_14, %c0_15] : memref<32x128xf32, #tpu.memory_space<vmem>>, vector<32x128xf32>
    %c0_16 = arith.constant 0 : index
    %c0_17 = arith.constant 0 : index
    %17 = vector.load %arg7[%c0_16, %c0_17] : memref<1x128xf32, #tpu.memory_space<vmem>>, vector<1x128xf32>
    %18 = vector.shape_cast %17 : vector<1x128xf32> to vector<1x128xf32>
    %19 = vector.broadcast %18 : vector<1x128xf32> to vector<2x128xf32>
    %cst_18 = arith.constant 0.000000e+00 : f32
    %20 = vector.broadcast %cst_18 : f32 to vector<2x32xf32>
    %c0_19 = arith.constant 0 : index
    %c0_20 = arith.constant 0 : index
    %21 = vector.load %arg11[%c0_19, %c0_20] : memref<16x128xf32, #tpu.memory_space<vmem>>, vector<2x128xf32>
    %cst_21 = arith.constant dense<0.000000e+00> : vector<2x128xf32>
    %22 = tpu.matmul %20, %14, %cst_21 {dimension_numbers = #tpu.dot_dimension_numbers<[1], [0], [0], [1], [0, 0, 1, 1], [], []>} : vector<2x32xf32>, vector<32x128xf32>, vector<2x128xf32> -> vector<2x128xf32>
    %23 = arith.addf %21, %22 : vector<2x128xf32>
    %24 = vector.extract_strided_slice %23 {offsets = [0, 0], sizes = [2, 96], strides = [1, 1]} : vector<2x128xf32> to vector<2x96xf32>
    %25 = arith.negf %24 : vector<2x96xf32>
    %26 = math.exp %25 : vector<2x96xf32>
    %cst_22 = arith.constant 1.000000e+00 : f32
    %27 = vector.broadcast %cst_22 : f32 to vector<2x96xf32>
    %28 = arith.addf %27, %26 : vector<2x96xf32>
    %29 = arith.divf %27, %28 : vector<2x96xf32>
    %30 = vector.extract_strided_slice %29 {offsets = [0, 0], sizes = [2, 32], strides = [1, 1]} : vector<2x96xf32> to vector<2x32xf32>
    %31 = vector.extract_strided_slice %29 {offsets = [0, 32], sizes = [2, 32], strides = [1, 1]} : vector<2x96xf32> to vector<2x32xf32>
    %32 = vector.extract_strided_slice %29 {offsets = [0, 64], sizes = [2, 32], strides = [1, 1]} : vector<2x96xf32> to vector<2x32xf32>
    %33 = vector.extract_strided_slice %23 {offsets = [0, 96], sizes = [2, 32], strides = [1, 1]} : vector<2x128xf32> to vector<2x32xf32>
    %34 = math.tanh %33 : vector<2x32xf32>
    %35 = arith.mulf %31, %20 : vector<2x32xf32>
    %36 = arith.mulf %30, %34 : vector<2x32xf32>
    %37 = arith.addf %35, %36 : vector<2x32xf32>
    %38 = math.tanh %37 : vector<2x32xf32>
    %39 = arith.mulf %32, %38 : vector<2x32xf32>
    %cst_23 = arith.constant dense<0.000000e+00> : vector<2x128xf32>
    %40 = tpu.matmul %39, %15, %cst_23 {dimension_numbers = #tpu.dot_dimension_numbers<[1], [0], [0], [1], [0, 0, 1, 1], [], []>} : vector<2x32xf32>, vector<32x128xf32>, vector<2x128xf32> -> vector<2x128xf32>
    %cst_24 = arith.constant dense<0.000000e+00> : vector<2x128xf32>
    %41 = tpu.matmul %20, %16, %cst_24 {dimension_numbers = #tpu.dot_dimension_numbers<[1], [0], [0], [1], [0, 0, 1, 1], [], []>} : vector<2x32xf32>, vector<32x128xf32>, vector<2x128xf32> -> vector<2x128xf32>
    %42 = arith.addf %40, %41 : vector<2x128xf32>
    %43 = arith.addf %42, %19 : vector<2x128xf32>
    %44 = vector.extract_strided_slice %43 {offsets = [0, 0], sizes = [2, 96], strides = [1, 1]} : vector<2x128xf32> to vector<2x96xf32>
    %45 = arith.negf %44 : vector<2x96xf32>
    %46 = math.exp %45 : vector<2x96xf32>
    %cst_25 = arith.constant 1.000000e+00 : f32
    %47 = vector.broadcast %cst_25 : f32 to vector<2x96xf32>
    %48 = arith.addf %47, %46 : vector<2x96xf32>
    %49 = arith.divf %47, %48 : vector<2x96xf32>
    %50 = vector.extract_strided_slice %49 {offsets = [0, 0], sizes = [2, 32], strides = [1, 1]} : vector<2x96xf32> to vector<2x32xf32>
    %51 = vector.extract_strided_slice %49 {offsets = [0, 32], sizes = [2, 32], strides = [1, 1]} : vector<2x96xf32> to vector<2x32xf32>
    %52 = vector.extract_strided_slice %49 {offsets = [0, 64], sizes = [2, 32], strides = [1, 1]} : vector<2x96xf32> to vector<2x32xf32>
    %53 = vector.extract_strided_slice %43 {offsets = [0, 96], sizes = [2, 32], strides = [1, 1]} : vector<2x128xf32> to vector<2x32xf32>
    %54 = math.tanh %53 : vector<2x32xf32>
    %55 = arith.mulf %51, %20 : vector<2x32xf32>
    %56 = arith.mulf %50, %54 : vector<2x32xf32>
    %57 = arith.addf %55, %56 : vector<2x32xf32>
    %58 = math.tanh %57 : vector<2x32xf32>
    %59 = arith.mulf %52, %58 : vector<2x32xf32>
    %c2 = arith.constant 2 : index
    %c0_26 = arith.constant 0 : index
    %60 = vector.load %arg11[%c2, %c0_26] : memref<16x128xf32, #tpu.memory_space<vmem>>, vector<2x128xf32>
    %cst_27 = arith.constant dense<0.000000e+00> : vector<2x128xf32>
    %61 = tpu.matmul %39, %14, %cst_27 {dimension_numbers = #tpu.dot_dimension_numbers<[1], [0], [0], [1], [0, 0, 1, 1], [], []>} : vector<2x32xf32>, vector<32x128xf32>, vector<2x128xf32> -> vector<2x128xf32>
    %62 = arith.addf %60, %61 : vector<2x128xf32>
    %63 = vector.extract_strided_slice %62 {offsets = [0, 0], sizes = [2, 96], strides = [1, 1]} : vector<2x128xf32> to vector<2x96xf32>
    %64 = arith.negf %63 : vector<2x96xf32>
    %65 = math.exp %64 : vector<2x96xf32>
    %cst_28 = arith.constant 1.000000e+00 : f32
    %66 = vector.broadcast %cst_28 : f32 to vector<2x96xf32>
    %67 = arith.addf %66, %65 : vector<2x96xf32>
    %68 = arith.divf %66, %67 : vector<2x96xf32>
    %69 = vector.extract_strided_slice %68 {offsets = [0, 0], sizes = [2, 32], strides = [1, 1]} : vector<2x96xf32> to vector<2x32xf32>
    %70 = vector.extract_strided_slice %68 {offsets = [0, 32], sizes = [2, 32], strides = [1, 1]} : vector<2x96xf32> to vector<2x32xf32>
    %71 = vector.extract_strided_slice %68 {offsets = [0, 64], sizes = [2, 32], strides = [1, 1]} : vector<2x96xf32> to vector<2x32xf32>
    %72 = vector.extract_strided_slice %62 {offsets = [0, 96], sizes = [2, 32], strides = [1, 1]} : vector<2x128xf32> to vector<2x32xf32>
    %73 = math.tanh %72 : vector<2x32xf32>
    %74 = arith.mulf %70, %37 : vector<2x32xf32>
    %75 = arith.mulf %69, %73 : vector<2x32xf32>
    %76 = arith.addf %74, %75 : vector<2x32xf32>
    %77 = math.tanh %76 : vector<2x32xf32>
    %78 = arith.mulf %71, %77 : vector<2x32xf32>
    %cst_29 = arith.constant dense<0.000000e+00> : vector<2x128xf32>
    %79 = tpu.matmul %78, %15, %cst_29 {dimension_numbers = #tpu.dot_dimension_numbers<[1], [0], [0], [1], [0, 0, 1, 1], [], []>} : vector<2x32xf32>, vector<32x128xf32>, vector<2x128xf32> -> vector<2x128xf32>
    %cst_30 = arith.constant dense<0.000000e+00> : vector<2x128xf32>
    %80 = tpu.matmul %59, %16, %cst_30 {dimension_numbers = #tpu.dot_dimension_numbers<[1], [0], [0], [1], [0, 0, 1, 1], [], []>} : vector<2x32xf32>, vector<32x128xf32>, vector<2x128xf32> -> vector<2x128xf32>
    %81 = arith.addf %79, %80 : vector<2x128xf32>
    %82 = arith.addf %81, %19 : vector<2x128xf32>
    %83 = vector.extract_strided_slice %82 {offsets = [0, 0], sizes = [2, 96], strides = [1, 1]} : vector<2x128xf32> to vector<2x96xf32>
    %84 = arith.negf %83 : vector<2x96xf32>
    %85 = math.exp %84 : vector<2x96xf32>
    %cst_31 = arith.constant 1.000000e+00 : f32
    %86 = vector.broadcast %cst_31 : f32 to vector<2x96xf32>
    %87 = arith.addf %86, %85 : vector<2x96xf32>
    %88 = arith.divf %86, %87 : vector<2x96xf32>
    %89 = vector.extract_strided_slice %88 {offsets = [0, 0], sizes = [2, 32], strides = [1, 1]} : vector<2x96xf32> to vector<2x32xf32>
    %90 = vector.extract_strided_slice %88 {offsets = [0, 32], sizes = [2, 32], strides = [1, 1]} : vector<2x96xf32> to vector<2x32xf32>
    %91 = vector.extract_strided_slice %88 {offsets = [0, 64], sizes = [2, 32], strides = [1, 1]} : vector<2x96xf32> to vector<2x32xf32>
    %92 = vector.extract_strided_slice %82 {offsets = [0, 96], sizes = [2, 32], strides = [1, 1]} : vector<2x128xf32> to vector<2x32xf32>
    %93 = math.tanh %92 : vector<2x32xf32>
    %94 = arith.mulf %90, %57 : vector<2x32xf32>
    %95 = arith.mulf %89, %93 : vector<2x32xf32>
    %96 = arith.addf %94, %95 : vector<2x32xf32>
    %97 = math.tanh %96 : vector<2x32xf32>
    %98 = arith.mulf %91, %97 : vector<2x32xf32>
    %c4 = arith.constant 4 : index
    %c0_32 = arith.constant 0 : index
    %99 = vector.load %arg11[%c4, %c0_32] : memref<16x128xf32, #tpu.memory_space<vmem>>, vector<2x128xf32>
    %cst_33 = arith.constant dense<0.000000e+00> : vector<2x128xf32>
    %100 = tpu.matmul %78, %14, %cst_33 {dimension_numbers = #tpu.dot_dimension_numbers<[1], [0], [0], [1], [0, 0, 1, 1], [], []>} : vector<2x32xf32>, vector<32x128xf32>, vector<2x128xf32> -> vector<2x128xf32>
    %101 = arith.addf %99, %100 : vector<2x128xf32>
    %102 = vector.extract_strided_slice %101 {offsets = [0, 0], sizes = [2, 96], strides = [1, 1]} : vector<2x128xf32> to vector<2x96xf32>
    %103 = arith.negf %102 : vector<2x96xf32>
    %104 = math.exp %103 : vector<2x96xf32>
    %cst_34 = arith.constant 1.000000e+00 : f32
    %105 = vector.broadcast %cst_34 : f32 to vector<2x96xf32>
    %106 = arith.addf %105, %104 : vector<2x96xf32>
    %107 = arith.divf %105, %106 : vector<2x96xf32>
    %108 = vector.extract_strided_slice %107 {offsets = [0, 0], sizes = [2, 32], strides = [1, 1]} : vector<2x96xf32> to vector<2x32xf32>
    %109 = vector.extract_strided_slice %107 {offsets = [0, 32], sizes = [2, 32], strides = [1, 1]} : vector<2x96xf32> to vector<2x32xf32>
    %110 = vector.extract_strided_slice %107 {offsets = [0, 64], sizes = [2, 32], strides = [1, 1]} : vector<2x96xf32> to vector<2x32xf32>
    %111 = vector.extract_strided_slice %101 {offsets = [0, 96], sizes = [2, 32], strides = [1, 1]} : vector<2x128xf32> to vector<2x32xf32>
    %112 = math.tanh %111 : vector<2x32xf32>
    %113 = arith.mulf %109, %76 : vector<2x32xf32>
    %114 = arith.mulf %108, %112 : vector<2x32xf32>
    %115 = arith.addf %113, %114 : vector<2x32xf32>
    %116 = math.tanh %115 : vector<2x32xf32>
    %117 = arith.mulf %110, %116 : vector<2x32xf32>
    %cst_35 = arith.constant dense<0.000000e+00> : vector<2x128xf32>
    %118 = tpu.matmul %117, %15, %cst_35 {dimension_numbers = #tpu.dot_dimension_numbers<[1], [0], [0], [1], [0, 0, 1, 1], [], []>} : vector<2x32xf32>, vector<32x128xf32>, vector<2x128xf32> -> vector<2x128xf32>
    %cst_36 = arith.constant dense<0.000000e+00> : vector<2x128xf32>
    %119 = tpu.matmul %98, %16, %cst_36 {dimension_numbers = #tpu.dot_dimension_numbers<[1], [0], [0], [1], [0, 0, 1, 1], [], []>} : vector<2x32xf32>, vector<32x128xf32>, vector<2x128xf32> -> vector<2x128xf32>
    %120 = arith.addf %118, %119 : vector<2x128xf32>
    %121 = arith.addf %120, %19 : vector<2x128xf32>
    %122 = vector.extract_strided_slice %121 {offsets = [0, 0], sizes = [2, 96], strides = [1, 1]} : vector<2x128xf32> to vector<2x96xf32>
    %123 = arith.negf %122 : vector<2x96xf32>
    %124 = math.exp %123 : vector<2x96xf32>
    %cst_37 = arith.constant 1.000000e+00 : f32
    %125 = vector.broadcast %cst_37 : f32 to vector<2x96xf32>
    %126 = arith.addf %125, %124 : vector<2x96xf32>
    %127 = arith.divf %125, %126 : vector<2x96xf32>
    %128 = vector.extract_strided_slice %127 {offsets = [0, 0], sizes = [2, 32], strides = [1, 1]} : vector<2x96xf32> to vector<2x32xf32>
    %129 = vector.extract_strided_slice %127 {offsets = [0, 32], sizes = [2, 32], strides = [1, 1]} : vector<2x96xf32> to vector<2x32xf32>
    %130 = vector.extract_strided_slice %127 {offsets = [0, 64], sizes = [2, 32], strides = [1, 1]} : vector<2x96xf32> to vector<2x32xf32>
    %131 = vector.extract_strided_slice %121 {offsets = [0, 96], sizes = [2, 32], strides = [1, 1]} : vector<2x128xf32> to vector<2x32xf32>
    %132 = math.tanh %131 : vector<2x32xf32>
    %133 = arith.mulf %129, %96 : vector<2x32xf32>
    %134 = arith.mulf %128, %132 : vector<2x32xf32>
    %135 = arith.addf %133, %134 : vector<2x32xf32>
    %136 = math.tanh %135 : vector<2x32xf32>
    %137 = arith.mulf %130, %136 : vector<2x32xf32>
    %c6 = arith.constant 6 : index
    %c0_38 = arith.constant 0 : index
    %138 = vector.load %arg11[%c6, %c0_38] : memref<16x128xf32, #tpu.memory_space<vmem>>, vector<2x128xf32>
    %cst_39 = arith.constant dense<0.000000e+00> : vector<2x128xf32>
    %139 = tpu.matmul %117, %14, %cst_39 {dimension_numbers = #tpu.dot_dimension_numbers<[1], [0], [0], [1], [0, 0, 1, 1], [], []>} : vector<2x32xf32>, vector<32x128xf32>, vector<2x128xf32> -> vector<2x128xf32>
    %140 = arith.addf %138, %139 : vector<2x128xf32>
    %141 = vector.extract_strided_slice %140 {offsets = [0, 0], sizes = [2, 96], strides = [1, 1]} : vector<2x128xf32> to vector<2x96xf32>
    %142 = arith.negf %141 : vector<2x96xf32>
    %143 = math.exp %142 : vector<2x96xf32>
    %cst_40 = arith.constant 1.000000e+00 : f32
    %144 = vector.broadcast %cst_40 : f32 to vector<2x96xf32>
    %145 = arith.addf %144, %143 : vector<2x96xf32>
    %146 = arith.divf %144, %145 : vector<2x96xf32>
    %147 = vector.extract_strided_slice %146 {offsets = [0, 0], sizes = [2, 32], strides = [1, 1]} : vector<2x96xf32> to vector<2x32xf32>
    %148 = vector.extract_strided_slice %146 {offsets = [0, 32], sizes = [2, 32], strides = [1, 1]} : vector<2x96xf32> to vector<2x32xf32>
    %149 = vector.extract_strided_slice %146 {offsets = [0, 64], sizes = [2, 32], strides = [1, 1]} : vector<2x96xf32> to vector<2x32xf32>
    %150 = vector.extract_strided_slice %140 {offsets = [0, 96], sizes = [2, 32], strides = [1, 1]} : vector<2x128xf32> to vector<2x32xf32>
    %151 = math.tanh %150 : vector<2x32xf32>
    %152 = arith.mulf %148, %115 : vector<2x32xf32>
    %153 = arith.mulf %147, %151 : vector<2x32xf32>
    %154 = arith.addf %152, %153 : vector<2x32xf32>
    %155 = math.tanh %154 : vector<2x32xf32>
    %156 = arith.mulf %149, %155 : vector<2x32xf32>
    %cst_41 = arith.constant dense<0.000000e+00> : vector<2x128xf32>
    %157 = tpu.matmul %156, %15, %cst_41 {dimension_numbers = #tpu.dot_dimension_numbers<[1], [0], [0], [1], [0, 0, 1, 1], [], []>} : vector<2x32xf32>, vector<32x128xf32>, vector<2x128xf32> -> vector<2x128xf32>
    %cst_42 = arith.constant dense<0.000000e+00> : vector<2x128xf32>
    %158 = tpu.matmul %137, %16, %cst_42 {dimension_numbers = #tpu.dot_dimension_numbers<[1], [0], [0], [1], [0, 0, 1, 1], [], []>} : vector<2x32xf32>, vector<32x128xf32>, vector<2x128xf32> -> vector<2x128xf32>
    %159 = arith.addf %157, %158 : vector<2x128xf32>
    %160 = arith.addf %159, %19 : vector<2x128xf32>
    %161 = vector.extract_strided_slice %160 {offsets = [0, 0], sizes = [2, 96], strides = [1, 1]} : vector<2x128xf32> to vector<2x96xf32>
    %162 = arith.negf %161 : vector<2x96xf32>
    %163 = math.exp %162 : vector<2x96xf32>
    %cst_43 = arith.constant 1.000000e+00 : f32
    %164 = vector.broadcast %cst_43 : f32 to vector<2x96xf32>
    %165 = arith.addf %164, %163 : vector<2x96xf32>
    %166 = arith.divf %164, %165 : vector<2x96xf32>
    %167 = vector.extract_strided_slice %166 {offsets = [0, 0], sizes = [2, 32], strides = [1, 1]} : vector<2x96xf32> to vector<2x32xf32>
    %168 = vector.extract_strided_slice %166 {offsets = [0, 32], sizes = [2, 32], strides = [1, 1]} : vector<2x96xf32> to vector<2x32xf32>
    %169 = vector.extract_strided_slice %166 {offsets = [0, 64], sizes = [2, 32], strides = [1, 1]} : vector<2x96xf32> to vector<2x32xf32>
    %170 = vector.extract_strided_slice %160 {offsets = [0, 96], sizes = [2, 32], strides = [1, 1]} : vector<2x128xf32> to vector<2x32xf32>
    %171 = math.tanh %170 : vector<2x32xf32>
    %172 = arith.mulf %168, %135 : vector<2x32xf32>
    %173 = arith.mulf %167, %171 : vector<2x32xf32>
    %174 = arith.addf %172, %173 : vector<2x32xf32>
    %175 = math.tanh %174 : vector<2x32xf32>
    %176 = arith.mulf %169, %175 : vector<2x32xf32>
    %c8 = arith.constant 8 : index
    %c0_44 = arith.constant 0 : index
    %177 = vector.load %arg11[%c8, %c0_44] : memref<16x128xf32, #tpu.memory_space<vmem>>, vector<2x128xf32>
    %cst_45 = arith.constant dense<0.000000e+00> : vector<2x128xf32>
    %178 = tpu.matmul %156, %14, %cst_45 {dimension_numbers = #tpu.dot_dimension_numbers<[1], [0], [0], [1], [0, 0, 1, 1], [], []>} : vector<2x32xf32>, vector<32x128xf32>, vector<2x128xf32> -> vector<2x128xf32>
    %179 = arith.addf %177, %178 : vector<2x128xf32>
    %180 = vector.extract_strided_slice %179 {offsets = [0, 0], sizes = [2, 96], strides = [1, 1]} : vector<2x128xf32> to vector<2x96xf32>
    %181 = arith.negf %180 : vector<2x96xf32>
    %182 = math.exp %181 : vector<2x96xf32>
    %cst_46 = arith.constant 1.000000e+00 : f32
    %183 = vector.broadcast %cst_46 : f32 to vector<2x96xf32>
    %184 = arith.addf %183, %182 : vector<2x96xf32>
    %185 = arith.divf %183, %184 : vector<2x96xf32>
    %186 = vector.extract_strided_slice %185 {offsets = [0, 0], sizes = [2, 32], strides = [1, 1]} : vector<2x96xf32> to vector<2x32xf32>
    %187 = vector.extract_strided_slice %185 {offsets = [0, 32], sizes = [2, 32], strides = [1, 1]} : vector<2x96xf32> to vector<2x32xf32>
    %188 = vector.extract_strided_slice %185 {offsets = [0, 64], sizes = [2, 32], strides = [1, 1]} : vector<2x96xf32> to vector<2x32xf32>
    %189 = vector.extract_strided_slice %179 {offsets = [0, 96], sizes = [2, 32], strides = [1, 1]} : vector<2x128xf32> to vector<2x32xf32>
    %190 = math.tanh %189 : vector<2x32xf32>
    %191 = arith.mulf %187, %154 : vector<2x32xf32>
    %192 = arith.mulf %186, %190 : vector<2x32xf32>
    %193 = arith.addf %191, %192 : vector<2x32xf32>
    %194 = math.tanh %193 : vector<2x32xf32>
    %195 = arith.mulf %188, %194 : vector<2x32xf32>
    %cst_47 = arith.constant dense<0.000000e+00> : vector<2x128xf32>
    %196 = tpu.matmul %195, %15, %cst_47 {dimension_numbers = #tpu.dot_dimension_numbers<[1], [0], [0], [1], [0, 0, 1, 1], [], []>} : vector<2x32xf32>, vector<32x128xf32>, vector<2x128xf32> -> vector<2x128xf32>
    %cst_48 = arith.constant dense<0.000000e+00> : vector<2x128xf32>
    %197 = tpu.matmul %176, %16, %cst_48 {dimension_numbers = #tpu.dot_dimension_numbers<[1], [0], [0], [1], [0, 0, 1, 1], [], []>} : vector<2x32xf32>, vector<32x128xf32>, vector<2x128xf32> -> vector<2x128xf32>
    %198 = arith.addf %196, %197 : vector<2x128xf32>
    %199 = arith.addf %198, %19 : vector<2x128xf32>
    %200 = vector.extract_strided_slice %199 {offsets = [0, 0], sizes = [2, 96], strides = [1, 1]} : vector<2x128xf32> to vector<2x96xf32>
    %201 = arith.negf %200 : vector<2x96xf32>
    %202 = math.exp %201 : vector<2x96xf32>
    %cst_49 = arith.constant 1.000000e+00 : f32
    %203 = vector.broadcast %cst_49 : f32 to vector<2x96xf32>
    %204 = arith.addf %203, %202 : vector<2x96xf32>
    %205 = arith.divf %203, %204 : vector<2x96xf32>
    %206 = vector.extract_strided_slice %205 {offsets = [0, 0], sizes = [2, 32], strides = [1, 1]} : vector<2x96xf32> to vector<2x32xf32>
    %207 = vector.extract_strided_slice %205 {offsets = [0, 32], sizes = [2, 32], strides = [1, 1]} : vector<2x96xf32> to vector<2x32xf32>
    %208 = vector.extract_strided_slice %205 {offsets = [0, 64], sizes = [2, 32], strides = [1, 1]} : vector<2x96xf32> to vector<2x32xf32>
    %209 = vector.extract_strided_slice %199 {offsets = [0, 96], sizes = [2, 32], strides = [1, 1]} : vector<2x128xf32> to vector<2x32xf32>
    %210 = math.tanh %209 : vector<2x32xf32>
    %211 = arith.mulf %207, %174 : vector<2x32xf32>
    %212 = arith.mulf %206, %210 : vector<2x32xf32>
    %213 = arith.addf %211, %212 : vector<2x32xf32>
    %214 = math.tanh %213 : vector<2x32xf32>
    %215 = arith.mulf %208, %214 : vector<2x32xf32>
    %c10 = arith.constant 10 : index
    %c0_50 = arith.constant 0 : index
    %216 = vector.load %arg11[%c10, %c0_50] : memref<16x128xf32, #tpu.memory_space<vmem>>, vector<2x128xf32>
    %cst_51 = arith.constant dense<0.000000e+00> : vector<2x128xf32>
    %217 = tpu.matmul %195, %14, %cst_51 {dimension_numbers = #tpu.dot_dimension_numbers<[1], [0], [0], [1], [0, 0, 1, 1], [], []>} : vector<2x32xf32>, vector<32x128xf32>, vector<2x128xf32> -> vector<2x128xf32>
    %218 = arith.addf %216, %217 : vector<2x128xf32>
    %219 = vector.extract_strided_slice %218 {offsets = [0, 0], sizes = [2, 96], strides = [1, 1]} : vector<2x128xf32> to vector<2x96xf32>
    %220 = arith.negf %219 : vector<2x96xf32>
    %221 = math.exp %220 : vector<2x96xf32>
    %cst_52 = arith.constant 1.000000e+00 : f32
    %222 = vector.broadcast %cst_52 : f32 to vector<2x96xf32>
    %223 = arith.addf %222, %221 : vector<2x96xf32>
    %224 = arith.divf %222, %223 : vector<2x96xf32>
    %225 = vector.extract_strided_slice %224 {offsets = [0, 0], sizes = [2, 32], strides = [1, 1]} : vector<2x96xf32> to vector<2x32xf32>
    %226 = vector.extract_strided_slice %224 {offsets = [0, 32], sizes = [2, 32], strides = [1, 1]} : vector<2x96xf32> to vector<2x32xf32>
    %227 = vector.extract_strided_slice %224 {offsets = [0, 64], sizes = [2, 32], strides = [1, 1]} : vector<2x96xf32> to vector<2x32xf32>
    %228 = vector.extract_strided_slice %218 {offsets = [0, 96], sizes = [2, 32], strides = [1, 1]} : vector<2x128xf32> to vector<2x32xf32>
    %229 = math.tanh %228 : vector<2x32xf32>
    %230 = arith.mulf %226, %193 : vector<2x32xf32>
    %231 = arith.mulf %225, %229 : vector<2x32xf32>
    %232 = arith.addf %230, %231 : vector<2x32xf32>
    %233 = math.tanh %232 : vector<2x32xf32>
    %234 = arith.mulf %227, %233 : vector<2x32xf32>
    %cst_53 = arith.constant dense<0.000000e+00> : vector<2x128xf32>
    %235 = tpu.matmul %234, %15, %cst_53 {dimension_numbers = #tpu.dot_dimension_numbers<[1], [0], [0], [1], [0, 0, 1, 1], [], []>} : vector<2x32xf32>, vector<32x128xf32>, vector<2x128xf32> -> vector<2x128xf32>
    %cst_54 = arith.constant dense<0.000000e+00> : vector<2x128xf32>
    %236 = tpu.matmul %215, %16, %cst_54 {dimension_numbers = #tpu.dot_dimension_numbers<[1], [0], [0], [1], [0, 0, 1, 1], [], []>} : vector<2x32xf32>, vector<32x128xf32>, vector<2x128xf32> -> vector<2x128xf32>
    %237 = arith.addf %235, %236 : vector<2x128xf32>
    %238 = arith.addf %237, %19 : vector<2x128xf32>
    %239 = vector.extract_strided_slice %238 {offsets = [0, 0], sizes = [2, 96], strides = [1, 1]} : vector<2x128xf32> to vector<2x96xf32>
    %240 = arith.negf %239 : vector<2x96xf32>
    %241 = math.exp %240 : vector<2x96xf32>
    %cst_55 = arith.constant 1.000000e+00 : f32
    %242 = vector.broadcast %cst_55 : f32 to vector<2x96xf32>
    %243 = arith.addf %242, %241 : vector<2x96xf32>
    %244 = arith.divf %242, %243 : vector<2x96xf32>
    %245 = vector.extract_strided_slice %244 {offsets = [0, 0], sizes = [2, 32], strides = [1, 1]} : vector<2x96xf32> to vector<2x32xf32>
    %246 = vector.extract_strided_slice %244 {offsets = [0, 32], sizes = [2, 32], strides = [1, 1]} : vector<2x96xf32> to vector<2x32xf32>
    %247 = vector.extract_strided_slice %244 {offsets = [0, 64], sizes = [2, 32], strides = [1, 1]} : vector<2x96xf32> to vector<2x32xf32>
    %248 = vector.extract_strided_slice %238 {offsets = [0, 96], sizes = [2, 32], strides = [1, 1]} : vector<2x128xf32> to vector<2x32xf32>
    %249 = math.tanh %248 : vector<2x32xf32>
    %250 = arith.mulf %246, %213 : vector<2x32xf32>
    %251 = arith.mulf %245, %249 : vector<2x32xf32>
    %252 = arith.addf %250, %251 : vector<2x32xf32>
    %253 = math.tanh %252 : vector<2x32xf32>
    %254 = arith.mulf %247, %253 : vector<2x32xf32>
    %c12 = arith.constant 12 : index
    %c0_56 = arith.constant 0 : index
    %255 = vector.load %arg11[%c12, %c0_56] : memref<16x128xf32, #tpu.memory_space<vmem>>, vector<2x128xf32>
    %cst_57 = arith.constant dense<0.000000e+00> : vector<2x128xf32>
    %256 = tpu.matmul %234, %14, %cst_57 {dimension_numbers = #tpu.dot_dimension_numbers<[1], [0], [0], [1], [0, 0, 1, 1], [], []>} : vector<2x32xf32>, vector<32x128xf32>, vector<2x128xf32> -> vector<2x128xf32>
    %257 = arith.addf %255, %256 : vector<2x128xf32>
    %258 = vector.extract_strided_slice %257 {offsets = [0, 0], sizes = [2, 96], strides = [1, 1]} : vector<2x128xf32> to vector<2x96xf32>
    %259 = arith.negf %258 : vector<2x96xf32>
    %260 = math.exp %259 : vector<2x96xf32>
    %cst_58 = arith.constant 1.000000e+00 : f32
    %261 = vector.broadcast %cst_58 : f32 to vector<2x96xf32>
    %262 = arith.addf %261, %260 : vector<2x96xf32>
    %263 = arith.divf %261, %262 : vector<2x96xf32>
    %264 = vector.extract_strided_slice %263 {offsets = [0, 0], sizes = [2, 32], strides = [1, 1]} : vector<2x96xf32> to vector<2x32xf32>
    %265 = vector.extract_strided_slice %263 {offsets = [0, 32], sizes = [2, 32], strides = [1, 1]} : vector<2x96xf32> to vector<2x32xf32>
    %266 = vector.extract_strided_slice %263 {offsets = [0, 64], sizes = [2, 32], strides = [1, 1]} : vector<2x96xf32> to vector<2x32xf32>
    %267 = vector.extract_strided_slice %257 {offsets = [0, 96], sizes = [2, 32], strides = [1, 1]} : vector<2x128xf32> to vector<2x32xf32>
    %268 = math.tanh %267 : vector<2x32xf32>
    %269 = arith.mulf %265, %232 : vector<2x32xf32>
    %270 = arith.mulf %264, %268 : vector<2x32xf32>
    %271 = arith.addf %269, %270 : vector<2x32xf32>
    %272 = math.tanh %271 : vector<2x32xf32>
    %273 = arith.mulf %266, %272 : vector<2x32xf32>
    %cst_59 = arith.constant dense<0.000000e+00> : vector<2x128xf32>
    %274 = tpu.matmul %273, %15, %cst_59 {dimension_numbers = #tpu.dot_dimension_numbers<[1], [0], [0], [1], [0, 0, 1, 1], [], []>} : vector<2x32xf32>, vector<32x128xf32>, vector<2x128xf32> -> vector<2x128xf32>
    %cst_60 = arith.constant dense<0.000000e+00> : vector<2x128xf32>
    %275 = tpu.matmul %254, %16, %cst_60 {dimension_numbers = #tpu.dot_dimension_numbers<[1], [0], [0], [1], [0, 0, 1, 1], [], []>} : vector<2x32xf32>, vector<32x128xf32>, vector<2x128xf32> -> vector<2x128xf32>
    %276 = arith.addf %274, %275 : vector<2x128xf32>
    %277 = arith.addf %276, %19 : vector<2x128xf32>
    %278 = vector.extract_strided_slice %277 {offsets = [0, 0], sizes = [2, 96], strides = [1, 1]} : vector<2x128xf32> to vector<2x96xf32>
    %279 = arith.negf %278 : vector<2x96xf32>
    %280 = math.exp %279 : vector<2x96xf32>
    %cst_61 = arith.constant 1.000000e+00 : f32
    %281 = vector.broadcast %cst_61 : f32 to vector<2x96xf32>
    %282 = arith.addf %281, %280 : vector<2x96xf32>
    %283 = arith.divf %281, %282 : vector<2x96xf32>
    %284 = vector.extract_strided_slice %283 {offsets = [0, 0], sizes = [2, 32], strides = [1, 1]} : vector<2x96xf32> to vector<2x32xf32>
    %285 = vector.extract_strided_slice %283 {offsets = [0, 32], sizes = [2, 32], strides = [1, 1]} : vector<2x96xf32> to vector<2x32xf32>
    %286 = vector.extract_strided_slice %283 {offsets = [0, 64], sizes = [2, 32], strides = [1, 1]} : vector<2x96xf32> to vector<2x32xf32>
    %287 = vector.extract_strided_slice %277 {offsets = [0, 96], sizes = [2, 32], strides = [1, 1]} : vector<2x128xf32> to vector<2x32xf32>
    %288 = math.tanh %287 : vector<2x32xf32>
    %289 = arith.mulf %285, %252 : vector<2x32xf32>
    %290 = arith.mulf %284, %288 : vector<2x32xf32>
    %291 = arith.addf %289, %290 : vector<2x32xf32>
    %292 = math.tanh %291 : vector<2x32xf32>
    %293 = arith.mulf %286, %292 : vector<2x32xf32>
    %c14 = arith.constant 14 : index
    %c0_62 = arith.constant 0 : index
    %294 = vector.load %arg11[%c14, %c0_62] : memref<16x128xf32, #tpu.memory_space<vmem>>, vector<2x128xf32>
    %cst_63 = arith.constant dense<0.000000e+00> : vector<2x128xf32>
    %295 = tpu.matmul %273, %14, %cst_63 {dimension_numbers = #tpu.dot_dimension_numbers<[1], [0], [0], [1], [0, 0, 1, 1], [], []>} : vector<2x32xf32>, vector<32x128xf32>, vector<2x128xf32> -> vector<2x128xf32>
    %296 = arith.addf %294, %295 : vector<2x128xf32>
    %297 = vector.extract_strided_slice %296 {offsets = [0, 0], sizes = [2, 96], strides = [1, 1]} : vector<2x128xf32> to vector<2x96xf32>
    %298 = arith.negf %297 : vector<2x96xf32>
    %299 = math.exp %298 : vector<2x96xf32>
    %cst_64 = arith.constant 1.000000e+00 : f32
    %300 = vector.broadcast %cst_64 : f32 to vector<2x96xf32>
    %301 = arith.addf %300, %299 : vector<2x96xf32>
    %302 = arith.divf %300, %301 : vector<2x96xf32>
    %303 = vector.extract_strided_slice %302 {offsets = [0, 0], sizes = [2, 32], strides = [1, 1]} : vector<2x96xf32> to vector<2x32xf32>
    %304 = vector.extract_strided_slice %302 {offsets = [0, 32], sizes = [2, 32], strides = [1, 1]} : vector<2x96xf32> to vector<2x32xf32>
    %305 = vector.extract_strided_slice %302 {offsets = [0, 64], sizes = [2, 32], strides = [1, 1]} : vector<2x96xf32> to vector<2x32xf32>
    %306 = vector.extract_strided_slice %296 {offsets = [0, 96], sizes = [2, 32], strides = [1, 1]} : vector<2x128xf32> to vector<2x32xf32>
    %307 = math.tanh %306 : vector<2x32xf32>
    %308 = arith.mulf %304, %271 : vector<2x32xf32>
    %309 = arith.mulf %303, %307 : vector<2x32xf32>
    %310 = arith.addf %308, %309 : vector<2x32xf32>
    %311 = math.tanh %310 : vector<2x32xf32>
    %312 = arith.mulf %305, %311 : vector<2x32xf32>
    %cst_65 = arith.constant dense<0.000000e+00> : vector<2x128xf32>
    %313 = tpu.matmul %312, %15, %cst_65 {dimension_numbers = #tpu.dot_dimension_numbers<[1], [0], [0], [1], [0, 0, 1, 1], [], []>} : vector<2x32xf32>, vector<32x128xf32>, vector<2x128xf32> -> vector<2x128xf32>
    %cst_66 = arith.constant dense<0.000000e+00> : vector<2x128xf32>
    %314 = tpu.matmul %293, %16, %cst_66 {dimension_numbers = #tpu.dot_dimension_numbers<[1], [0], [0], [1], [0, 0, 1, 1], [], []>} : vector<2x32xf32>, vector<32x128xf32>, vector<2x128xf32> -> vector<2x128xf32>
    %315 = arith.addf %313, %314 : vector<2x128xf32>
    %316 = arith.addf %315, %19 : vector<2x128xf32>
    %317 = vector.extract_strided_slice %316 {offsets = [0, 0], sizes = [2, 96], strides = [1, 1]} : vector<2x128xf32> to vector<2x96xf32>
    %318 = arith.negf %317 : vector<2x96xf32>
    %319 = math.exp %318 : vector<2x96xf32>
    %cst_67 = arith.constant 1.000000e+00 : f32
    %320 = vector.broadcast %cst_67 : f32 to vector<2x96xf32>
    %321 = arith.addf %320, %319 : vector<2x96xf32>
    %322 = arith.divf %320, %321 : vector<2x96xf32>
    %323 = vector.extract_strided_slice %322 {offsets = [0, 0], sizes = [2, 32], strides = [1, 1]} : vector<2x96xf32> to vector<2x32xf32>
    %324 = vector.extract_strided_slice %322 {offsets = [0, 32], sizes = [2, 32], strides = [1, 1]} : vector<2x96xf32> to vector<2x32xf32>
    %325 = vector.extract_strided_slice %322 {offsets = [0, 64], sizes = [2, 32], strides = [1, 1]} : vector<2x96xf32> to vector<2x32xf32>
    %326 = vector.extract_strided_slice %316 {offsets = [0, 96], sizes = [2, 32], strides = [1, 1]} : vector<2x128xf32> to vector<2x32xf32>
    %327 = math.tanh %326 : vector<2x32xf32>
    %328 = arith.mulf %324, %291 : vector<2x32xf32>
    %329 = arith.mulf %323, %327 : vector<2x32xf32>
    %330 = arith.addf %328, %329 : vector<2x32xf32>
    %331 = math.tanh %330 : vector<2x32xf32>
    %332 = arith.mulf %325, %331 : vector<2x32xf32>
    %c0_68 = arith.constant 0 : index
    %c0_69 = arith.constant 0 : index
    %333 = vector.load %arg8[%c0_68, %c0_69] : memref<32x8xf32, #tpu.memory_space<vmem>>, vector<32x8xf32>
    %cst_70 = arith.constant dense<0.000000e+00> : vector<2x8xf32>
    %334 = tpu.matmul %332, %333, %cst_70 {dimension_numbers = #tpu.dot_dimension_numbers<[1], [0], [0], [1], [0, 0, 1, 1], [], []>} : vector<2x32xf32>, vector<32x8xf32>, vector<2x8xf32> -> vector<2x8xf32>
    %c0_71 = arith.constant 0 : index
    %c0_72 = arith.constant 0 : index
    %335 = vector.load %arg9[%c0_71, %c0_72] : memref<1x8xf32, #tpu.memory_space<vmem>>, vector<1x8xf32>
    %336 = vector.broadcast %335 : vector<1x8xf32> to vector<2x8xf32>
    %337 = arith.addf %334, %336 : vector<2x8xf32>
    %c0_73 = arith.constant 0 : index
    %c0_74 = arith.constant 0 : index
    %338 = vector.load %arg10[%c0_73, %c0_74] : memref<2x8xf32, #tpu.memory_space<vmem>>, vector<2x8xf32>
    tpu.vector_store %arg10[%c0_73, %c0_74], %337 {strides = array<i32>} : memref<2x8xf32, #tpu.memory_space<vmem>>, vector<2x8xf32>,
    return
  }
}

</mosaic_0001>

<llo_original>
// kernel: tpu_custom_call.1
$region0: #{tpu_custom_call.1}
  #allocation0 [shape = 'u32[]', space=smem, size = 0x4, offset = 0x4, fixed_abs, tag = 'smem constant byte address 0x4 - core index']
  #allocation1 [shape = 'u32[144,128]{1,0:T(1,128)}', space=vmem, size = 0x12000, scoped, tag = 'internal scratch']
  #allocation2 [shape = 'f32[16,128]{1,0:T(8,128)}', space=vmem, size = 0x2000, scoped, tag = 'scratch operand']
  %s0 = inlined_call_operand.vmem [shape: s32[16,1], index: 0, kind: input, shape index: {}]
  %s1 = inlined_call_operand.vmem [shape: f32[32,16], index: 1, kind: input, shape index: {}]
  %s2 = inlined_call_operand.vmem [shape: f32[16,128], index: 2, kind: input, shape index: {}]
  %s3 = inlined_call_operand.vmem [shape: f32[32,128], index: 3, kind: input, shape index: {}]
  %s4 = inlined_call_operand.hbm [shape: f32[1,128], index: 4, kind: input, shape index: {}]
  %s5 = inlined_call_operand.vmem [shape: f32[32,128], index: 5, kind: input, shape index: {}]
  %s6 = inlined_call_operand.vmem [shape: f32[32,128], index: 6, kind: input, shape index: {}]
  %s7 = inlined_call_operand.vmem [shape: f32[1,128], index: 7, kind: input, shape index: {}]
  %s8 = inlined_call_operand.vmem [shape: f32[32,8], index: 8, kind: input, shape index: {}]
  %s9 = inlined_call_operand.vmem [shape: f32[1,8], index: 9, kind: input, shape index: {}]
  %s10 = inlined_call_operand.hbm [shape: f32[2,8], index: 10, kind: output, shape index: {}]
  %s11 = sld [smem:[#allocation0]]
  $region54: #{tpu_custom_call.1} parent=0
    _
  %s13 = ssub.s32 1, %s11
  %s14 = scalar_select 0, %s13, %s11
  $region1: #{tpu_custom_call.1} parent=0
    #allocation3 [shape = 'u8[512]{0}', space=vmem, size = 0x400, scoped, tag = 'input window, operand 4, single buffered']
    #allocation4 [shape = 's32[1]{0}', space=sflag, size = 0x4, scoped, tag = 'scoped memory for tpu_custom_call.1']
    #allocation5 [shape = 's32[1]{0}', space=sflag, size = 0x4, scoped, tag = 'scoped memory for tpu_custom_call.1']
    #allocation6 [shape = 'u8[1024]{0}', space=vmem, size = 0x400, scoped, tag = 'output window, operand 0, single buffered']
    %15 = vsyncpa [#allocation4], 0
    %16 = vsyncpa [#allocation5], 0
    // Predicated region
    $region2: #{tpu_custom_call.1} parent=1 // pred_check
      _
    $region3: #{tpu_custom_call.1} parent=1 // pred_check_branch
      %18 = sbr.rel (0) target = $region5
    $region4: #{tpu_custom_call.1} parent=1 // pred_region
      _
    $region5: #{tpu_custom_call.1} parent=1 // pred_fallthru
      _
    // Predicated region
    $region6: #{tpu_custom_call.1} parent=1 // pred_check
      _
    $region7: #{tpu_custom_call.1} parent=1 // pred_check_branch
      %20 = sbr.rel (0) target = $region9
    $region8: #{tpu_custom_call.1} parent=1 // pred_region
      _
    $region9: #{tpu_custom_call.1} parent=1 // pred_fallthru
      _
    // Predicated region
    $region10: #{tpu_custom_call.1} parent=1 // pred_check
      _
    $region11: #{tpu_custom_call.1} parent=1 // pred_check_branch
      %22 = sbr.rel (0) target = $region13
    $region12: #{tpu_custom_call.1} parent=1 // pred_region
      _
    $region13: #{tpu_custom_call.1} parent=1 // pred_fallthru
      _
    // Predicated region
    $region14: #{tpu_custom_call.1} parent=1 // pred_check
      _
    $region15: #{tpu_custom_call.1} parent=1 // pred_check_branch
      %24 = sbr.rel (0) target = $region17
    $region16: #{tpu_custom_call.1} parent=1 // pred_region
      _
    $region17: #{tpu_custom_call.1} parent=1 // pred_fallthru
      _
    // Predicated region
    $region18: #{tpu_custom_call.1} parent=1 // pred_check
      _
    $region19: #{tpu_custom_call.1} parent=1 // pred_check_branch
      %26 = sbr.rel (0) target = $region21
    $region20: #{tpu_custom_call.1} parent=1 // pred_region
      %s28 = ssub.s32 16, 16
      %29 = vsyncadd [#allocation4], %s28
      %s31 = sshll.u32 [#allocation3], 4
      %s32 = int_to_ptr.vmem [resolvable:$true] %s31
      %34 = dma.hbm_to_vmem [thread:$0]  %s4, 16, %s32, [#allocation4]
    $region21: #{tpu_custom_call.1} parent=1 // pred_fallthru
      _
    // Predicated region
    $region22: #{tpu_custom_call.1} parent=1 // pred_check
      _
    $region23: #{tpu_custom_call.1} parent=1 // pred_check_branch
      %36 = sbr.rel (0) target = $region25
    $region24: #{tpu_custom_call.1} parent=1 // pred_region
      _
    $region25: #{tpu_custom_call.1} parent=1 // pred_fallthru
      _
    // Predicated region
    $region26: #{tpu_custom_call.1} parent=1 // pred_check
      _
    $region27: #{tpu_custom_call.1} parent=1 // pred_check_branch
      %38 = sbr.rel (0) target = $region29
    $region28: #{tpu_custom_call.1} parent=1 // pred_region
      _
    $region29: #{tpu_custom_call.1} parent=1 // pred_fallthru
      _
    // Predicated region
    $region30: #{tpu_custom_call.1} parent=1 // pred_check
      _
    $region31: #{tpu_custom_call.1} parent=1 // pred_check_branch
      %40 = sbr.rel (0) target = $region33
    $region32: #{tpu_custom_call.1} parent=1 // pred_region
      _
    $region33: #{tpu_custom_call.1} parent=1 // pred_fallthru
      _
    // Predicated region
    $region34: #{tpu_custom_call.1} parent=1 // pred_check
      _
    $region35: #{tpu_custom_call.1} parent=1 // pred_check_branch
      %42 = sbr.rel (0) target = $region37
    $region36: #{tpu_custom_call.1} parent=1 // pred_region
      _
    $region37: #{tpu_custom_call.1} parent=1 // pred_fallthru
      _
    // Predicated region
    $region38: #{tpu_custom_call.1} parent=1 // pred_check
      _
    $region39: #{tpu_custom_call.1} parent=1 // pred_check_branch
      %44 = sbr.rel (0) target = $region41
    $region40: #{tpu_custom_call.1} parent=1 // pred_region
      _
    $region41: #{tpu_custom_call.1} parent=1 // pred_fallthru
      _
    // Predicated region
    $region42: #{tpu_custom_call.1} parent=1 // pred_check
      _
    $region43: #{tpu_custom_call.1} parent=1 // pred_check_branch
      %46 = sbr.rel (0) target = $region45
    $region44: #{tpu_custom_call.1} parent=1 // pred_region
      %47 = dma.done [#allocation4], 16
    $region45: #{tpu_custom_call.1} parent=1 // pred_fallthru
      _
    %v48 = vld [vmem:[%s0] sm:$0xff]
    %v49 = vld [vmem:[%s0 + $0x8] sm:$0xff]
    %v50 = vlaneseq
    %v51 = vand.u32 %v50, 127
    %52 = vset.pattern.permute.xlu0 0
    %53 = vperm.xlu0 %52, %v48
    %v54 = vpop.permute.xlu0 %53
    %55 = vset.pattern.permute.xlu0 0
    %56 = vperm.xlu0 %55, %v49
    %v57 = vpop.permute.xlu0 %56
    %vm58 = vcmp.eq.s32.totalorder %v54, %v51
    %vm59 = vcmp.eq.s32.totalorder %v57, %v51
    %v60 = vsel %vm58, 1, 0
    %v61 = vsel %vm59, 1, 0
    %v62 = vcvt.s32.f32 %v60
    %v63 = vcvt.s32.f32 %v61
    %v64 = vld [vmem:[%s1] sm:$0xff]
    %v65 = vld [vmem:[%s1 + $0x8] sm:$0xff]
    %v66 = vld [vmem:[%s1 + $0x10] sm:$0xff]
    %v67 = vld [vmem:[%s1 + $0x18] sm:$0xff]
    %v68 = vld [vmem:[%s2] sm:$0xff]
    %v69 = vld [vmem:[%s2 + $0x8] sm:$0xff]
    %vm70 = vcmask 130048
    %v72 = vsel %vm70, %v64, 0
    %v75 = vsel %vm70, %v65, 0
    %v78 = vsel %vm70, %v66, 0
    %v81 = vsel %vm70, %v67, 0
    %83 = vmatprep.subr.mxu0 0.0
    %84 = vmatpush1.msra.mxu0 %v68
    %85 = vmatprep.subr.mxu0 0.0
    %86 = vmatpush1.msra.mxu0 %v69
    %87 = vmatprep.subr.mxu0 0.0
    %88 = vmatpush1.msra.mxu0 0.0
    %89 = vmatprep.subr.mxu0 0.0
    %90 = vmatpush1.msra.mxu0 0.0
    %91 = vmatprep.subr.mxu0 0.0
    %92 = vmatpush1.msra.mxu0 0.0
    %93 = vmatprep.subr.mxu0 0.0
    %94 = vmatpush1.msra.mxu0 0.0
    %95 = vmatprep.subr.mxu0 0.0
    %96 = vmatpush1.msra.mxu0 0.0
    %97 = vmatprep.subr.mxu0 0.0
    %98 = vmatpush1.msra.mxu0 0.0
    %99 = vmatprep.subr.mxu0 0.0
    %100 = vmatpush1.msra.mxu0 0.0
    %101 = vmatprep.subr.mxu0 0.0
    %102 = vmatpush1.msra.mxu0 0.0
    %103 = vmatprep.subr.mxu0 0.0
    %104 = vmatpush1.msra.mxu0 0.0
    %105 = vmatprep.subr.mxu0 0.0
    %106 = vmatpush1.msra.mxu0 0.0
    %107 = vmatprep.subr.mxu0 0.0
    %108 = vmatpush1.msra.mxu0 0.0
    %109 = vmatprep.subr.mxu0 0.0
    %110 = vmatpush1.msra.mxu0 0.0
    %111 = vmatprep.subr.mxu0 0.0
    %112 = vmatpush1.msra.mxu0 0.0
    %113 = vmatprep.subr.mxu0 0.0
    %114 = vmatpush1.msra.mxu0 0.0
    %115 = vmatprep.subr.mxu0 0.0
    %116 = vmatpush1.msra.mxu0 0.0
    %117 = vmatprep.subr.mxu0 0.0
    %118 = vmatpush1.msra.mxu0 0.0
    %119 = vmatprep.subr.mxu0 0.0
    %120 = vmatpush1.msra.mxu0 0.0
    %121 = vmatprep.subr.mxu0 0.0
    %122 = vmatpush1.msra.mxu0 0.0
    %123 = vmatprep.subr.mxu0 0.0
    %124 = vmatpush1.msra.mxu0 0.0
    %125 = vmatprep.subr.mxu0 0.0
    %126 = vmatpush1.msra.mxu0 0.0
    %127 = vmatprep.subr.mxu0 0.0
    %128 = vmatpush1.msra.mxu0 0.0
    %129 = vmatprep.subr.mxu0 0.0
    %130 = vmatpush1.msra.mxu0 0.0
    %131 = vmatprep.subr.mxu0 0.0
    %132 = vmatpush1.msra.mxu0 0.0
    %133 = vmatprep.subr.mxu0 0.0
    %134 = vmatpush1.msra.mxu0 0.0
    %135 = vmatprep.subr.mxu0 0.0
    %136 = vmatpush1.msra.mxu0 0.0
    %137 = vmatprep.subr.mxu0 0.0
    %138 = vmatpush1.msra.mxu0 0.0
    %139 = vmatprep.subr.mxu0 0.0
    %140 = vmatpush1.msra.mxu0 0.0
    %141 = vmatprep.subr.mxu0 0.0
    %142 = vmatpush1.msra.mxu0 0.0
    %143 = vmatprep.subr.mxu0 0.0
    %144 = vmatpush1.msra.mxu0 0.0
    %145 = vmatprep.subr.mxu0 0.0
    %146 = vmatpush1.msra.mxu0 0.0
    %147 = vmatprep.mubr.f32.mxu0 0.0
    %148 = vmatmul.mubr.f32.gmra.mrb[0].mxu0 %v72
    %v149 = vpop.f32.mrb[0].mxu0
    %v150 = vadd.f32 0.0, %v149
    %v151 = vpop.f32.mrb[0].mxu0
    %152 = vmatprep.mubr.f32.mxu0 0.0
    %153 = vmatmul.mubr.f32.gmra.mrb[0].mxu0 %v75
    %v154 = vpop.f32.mrb[0].mxu0
    %v155 = vadd.f32 0.0, %v154
    %v156 = vpop.f32.mrb[0].mxu0
    %157 = vmatprep.mubr.f32.mxu0 0.0
    %158 = vmatmul.mubr.f32.gmra.mrb[0].mxu0 %v78
    %v159 = vpop.f32.mrb[0].mxu0
    %v160 = vadd.f32 0.0, %v159
    %v161 = vpop.f32.mrb[0].mxu0
    %162 = vmatprep.mubr.f32.mxu0 0.0
    %163 = vmatmul.mubr.f32.gmra.mrb[0].mxu0 %v81
    %v164 = vpop.f32.mrb[0].mxu0
    %v165 = vadd.f32 0.0, %v164
    %v166 = vpop.f32.mrb[0].mxu0
    %167 = vdwg.mxu0
    %v168 = vld [vmem:[#allocation3] sm:$0x1]
    %v170 = vlaneseq
    %v171 = vshrl.u32 %v170, 7
    %v172 = vsub.s32 0, %v171
    %v173 = vrot.slane %v168, %v172
    %vm175 = vcmask 261120
    %v177 = vsel %vm175, %v62, 0
    %v180 = vsel %vm175, %v63, 0
    %182 = vmatprep.subr.mxu0 0.0
    %183 = vmatpush1.msra.mxu0 %v150
    %184 = vmatprep.subr.mxu0 0.0
    %185 = vmatpush1.msra.mxu0 %v155
    %186 = vmatprep.subr.mxu0 0.0
    %187 = vmatpush1.msra.mxu0 %v160
    %188 = vmatprep.subr.mxu0 0.0
    %189 = vmatpush1.msra.mxu0 %v165
    %190 = vmatprep.subr.mxu0 0.0
    %191 = vmatpush1.msra.mxu0 0.0
    %192 = vmatprep.subr.mxu0 0.0
    %193 = vmatpush1.msra.mxu0 0.0
    %194 = vmatprep.subr.mxu0 0.0
    %195 = vmatpush1.msra.mxu0 0.0
    %196 = vmatprep.subr.mxu0 0.0
    %197 = vmatpush1.msra.mxu0 0.0
    %198 = vmatprep.subr.mxu0 0.0
    %199 = vmatpush1.msra.mxu0 0.0
    %200 = vmatprep.subr.mxu0 0.0
    %201 = vmatpush1.msra.mxu0 0.0
    %202 = vmatprep.subr.mxu0 0.0
    %203 = vmatpush1.msra.mxu0 0.0
    %204 = vmatprep.subr.mxu0 0.0
    %205 = vmatpush1.msra.mxu0 0.0
    %206 = vmatprep.subr.mxu0 0.0
    %207 = vmatpush1.msra.mxu0 0.0
    %208 = vmatprep.subr.mxu0 0.0
    %209 = vmatpush1.msra.mxu0 0.0
    %210 = vmatprep.subr.mxu0 0.0
    %211 = vmatpush1.msra.mxu0 0.0
    %212 = vmatprep.subr.mxu0 0.0
    %213 = vmatpush1.msra.mxu0 0.0
    %214 = vmatprep.subr.mxu0 0.0
    %215 = vmatpush1.msra.mxu0 0.0
    %216 = vmatprep.subr.mxu0 0.0
    %217 = vmatpush1.msra.mxu0 0.0
    %218 = vmatprep.subr.mxu0 0.0
    %219 = vmatpush1.msra.mxu0 0.0
    %220 = vmatprep.subr.mxu0 0.0
    %221 = vmatpush1.msra.mxu0 0.0
    %222 = vmatprep.subr.mxu0 0.0
    %223 = vmatpush1.msra.mxu0 0.0
    %224 = vmatprep.subr.mxu0 0.0
    %225 = vmatpush1.msra.mxu0 0.0
    %226 = vmatprep.subr.mxu0 0.0
    %227 = vmatpush1.msra.mxu0 0.0
    %228 = vmatprep.subr.mxu0 0.0
    %229 = vmatpush1.msra.mxu0 0.0
    %230 = vmatprep.subr.mxu0 0.0
    %231 = vmatpush1.msra.mxu0 0.0
    %232 = vmatprep.subr.mxu0 0.0
    %233 = vmatpush1.msra.mxu0 0.0
    %234 = vmatprep.subr.mxu0 0.0
    %235 = vmatpush1.msra.mxu0 0.0
    %236 = vmatprep.subr.mxu0 0.0
    %237 = vmatpush1.msra.mxu0 0.0
    %238 = vmatprep.subr.mxu0 0.0
    %239 = vmatpush1.msra.mxu0 0.0
    %240 = vmatprep.subr.mxu0 0.0
    %241 = vmatpush1.msra.mxu0 0.0
    %242 = vmatprep.subr.mxu0 0.0
    %243 = vmatpush1.msra.mxu0 0.0
    %244 = vmatprep.subr.mxu0 0.0
    %245 = vmatpush1.msra.mxu0 0.0
    %246 = vmatprep.mubr.f32.mxu0 0.0
    %247 = vmatmul.mubr.f32.gmra.mrb[0].mxu0 %v177
    %v248 = vpop.f32.mrb[0].mxu0
    %v249 = vadd.f32 %v173, %v248
    %v250 = vpop.f32.mrb[0].mxu0
    %251 = vmatprep.mubr.f32.mxu0 0.0
    %252 = vmatmul.mubr.f32.gmra.mrb[0].mxu0 %v180
    %v253 = vpop.f32.mrb[0].mxu0
    %v254 = vadd.f32 %v173, %v253
    %v255 = vpop.f32.mrb[0].mxu0
    %256 = vdwg.mxu0
    %257 = vst [vmem:[#allocation2] sm:$0xff] %v249
    %258 = vst [vmem:[#allocation2 + $0x8] sm:$0xff] %v254
    %v259 = vld [vmem:[%s3] sm:$0xff]
    %v260 = vld [vmem:[%s3 + $0x8] sm:$0xff]
    %v261 = vld [vmem:[%s3 + $0x10] sm:$0xff]
    %v262 = vld [vmem:[%s3 + $0x18] sm:$0xff]
    %v263 = vld [vmem:[%s5] sm:$0xff]
    %v264 = vld [vmem:[%s5 + $0x8] sm:$0xff]
    %v265 = vld [vmem:[%s5 + $0x10] sm:$0xff]
    %v266 = vld [vmem:[%s5 + $0x18] sm:$0xff]
    %v267 = vld [vmem:[%s6] sm:$0xff]
    %v268 = vld [vmem:[%s6 + $0x8] sm:$0xff]
    %v269 = vld [vmem:[%s6 + $0x10] sm:$0xff]
    %v270 = vld [vmem:[%s6 + $0x18] sm:$0xff]
    %v271 = vld [vmem:[%s7] sm:$0x1]
    %v273 = vlaneseq
    %v274 = vshrl.u32 %v273, 7
    %v275 = vsub.s32 0, %v274
    %v276 = vrot.slane %v271, %v275
    %v278 = vld [vmem:[#allocation2] sm:$0x3]
    %v280 = vsel %vm175, 0.0, 0
    %282 = vmatprep.subr.mxu0 0.0
    %283 = vmatpush1.msra.mxu0 %v259
    %284 = vmatprep.subr.mxu0 0.0
    %285 = vmatpush1.msra.mxu0 %v260
    %286 = vmatprep.subr.mxu0 0.0
    %287 = vmatpush1.msra.mxu0 %v261
    %288 = vmatprep.subr.mxu0 0.0
    %289 = vmatpush1.msra.mxu0 %v262
    %290 = vmatprep.subr.mxu0 0.0
    %291 = vmatpush1.msra.mxu0 0.0
    %292 = vmatprep.subr.mxu0 0.0
    %293 = vmatpush1.msra.mxu0 0.0
    %294 = vmatprep.subr.mxu0 0.0
    %295 = vmatpush1.msra.mxu0 0.0
    %296 = vmatprep.subr.mxu0 0.0
    %297 = vmatpush1.msra.mxu0 0.0
    %298 = vmatprep.subr.mxu0 0.0
    %299 = vmatpush1.msra.mxu0 0.0
    %300 = vmatprep.subr.mxu0 0.0
    %301 = vmatpush1.msra.mxu0 0.0
    %302 = vmatprep.subr.mxu0 0.0
    %303 = vmatpush1.msra.mxu0 0.0
    %304 = vmatprep.subr.mxu0 0.0
    %305 = vmatpush1.msra.mxu0 0.0
    %306 = vmatprep.subr.mxu0 0.0
    %307 = vmatpush1.msra.mxu0 0.0
    %308 = vmatprep.subr.mxu0 0.0
    %309 = vmatpush1.msra.mxu0 0.0
    %310 = vmatprep.subr.mxu0 0.0
    %311 = vmatpush1.msra.mxu0 0.0
    %312 = vmatprep.subr.mxu0 0.0
    %313 = vmatpush1.msra.mxu0 0.0
    %314 = vmatprep.subr.mxu0 0.0
    %315 = vmatpush1.msra.mxu0 0.0
    %316 = vmatprep.subr.mxu0 0.0
    %317 = vmatpush1.msra.mxu0 0.0
    %318 = vmatprep.subr.mxu0 0.0
    %319 = vmatpush1.msra.mxu0 0.0
    %320 = vmatprep.subr.mxu0 0.0
    %321 = vmatpush1.msra.mxu0 0.0
    %322 = vmatprep.subr.mxu0 0.0
    %323 = vmatpush1.msra.mxu0 0.0
    %324 = vmatprep.subr.mxu0 0.0
    %325 = vmatpush1.msra.mxu0 0.0
    %326 = vmatprep.subr.mxu0 0.0
    %327 = vmatpush1.msra.mxu0 0.0
    %328 = vmatprep.subr.mxu0 0.0
    %329 = vmatpush1.msra.mxu0 0.0
    %330 = vmatprep.subr.mxu0 0.0
    %331 = vmatpush1.msra.mxu0 0.0
    %332 = vmatprep.subr.mxu0 0.0
    %333 = vmatpush1.msra.mxu0 0.0
    %334 = vmatprep.subr.mxu0 0.0
    %335 = vmatpush1.msra.mxu0 0.0
    %336 = vmatprep.subr.mxu0 0.0
    %337 = vmatpush1.msra.mxu0 0.0
    %338 = vmatprep.subr.mxu0 0.0
    %339 = vmatpush1.msra.mxu0 0.0
    %340 = vmatprep.subr.mxu0 0.0
    %341 = vmatpush1.msra.mxu0 0.0
    %342 = vmatprep.subr.mxu0 0.0
    %343 = vmatpush1.msra.mxu0 0.0
    %344 = vmatprep.subr.mxu0 0.0
    %345 = vmatpush1.msra.mxu0 0.0
    %346 = vmatprep.mubr.f32.mxu0 0.0
    %347 = vmatmul.mubr.f32.gmra.mrb[0].mxu0 %v280
    %v348 = vpop.f32.mrb[0].mxu0
    %v349 = vadd.f32 0.0, %v348
    %v350 = vpop.f32.mrb[0].mxu0
    %351 = vdwg.mxu0
    %v352 = vadd.f32 %v278, %v349
    %v353 = vxor.u32 %v352, 2147483648
    %v354 = vmul.f32 %v353, 1.442695
    %v355 = vpow.pop %v354
    %v356 = vadd.f32 %v355, 1.0
    %v357 = vrcp.pop %v356
    %v358 = vmul.f32 1.0, %v357
    %v359 = vtanh.pop %v352
    %v360 = vmul.f32 %v358, 0.0
    %362 = vrot.lane.b32.xlu0 %v359, 32
    %v363 = vpop.permute.xlu0 %362
    %v365 = vmul.f32 %v358, %v363
    %367 = vrot.lane.b32.xlu0 %v365, 32
    %v368 = vpop.permute.xlu0 %367
    %v370 = vadd.f32 %v360, %v368
    %v371 = vtanh.pop %v370
    %373 = vrot.lane.b32.xlu0 %v371, 32
    %v374 = vpop.permute.xlu0 %373
    %v376 = vmul.f32 %v358, %v374
    %377 = vmatprep.subr.mxu0 0.0
    %378 = vmatpush1.msra.mxu0 %v267
    %379 = vmatprep.subr.mxu0 0.0
    %380 = vmatpush1.msra.mxu0 %v268
    %381 = vmatprep.subr.mxu0 0.0
    %382 = vmatpush1.msra.mxu0 %v269
    %383 = vmatprep.subr.mxu0 0.0
    %384 = vmatpush1.msra.mxu0 %v270
    %385 = vmatprep.subr.mxu0 0.0
    %386 = vmatpush1.msra.mxu0 0.0
    %387 = vmatprep.subr.mxu0 0.0
    %388 = vmatpush1.msra.mxu0 0.0
    %389 = vmatprep.subr.mxu0 0.0
    %390 = vmatpush1.msra.mxu0 0.0
    %391 = vmatprep.subr.mxu0 0.0
    %392 = vmatpush1.msra.mxu0 0.0
    %393 = vmatprep.subr.mxu0 0.0
    %394 = vmatpush1.msra.mxu0 0.0
    %395 = vmatprep.subr.mxu0 0.0
    %396 = vmatpush1.msra.mxu0 0.0
    %397 = vmatprep.subr.mxu0 0.0
    %398 = vmatpush1.msra.mxu0 0.0
    %399 = vmatprep.subr.mxu0 0.0
    %400 = vmatpush1.msra.mxu0 0.0
    %401 = vmatprep.subr.mxu0 0.0
    %402 = vmatpush1.msra.mxu0 0.0
    %403 = vmatprep.subr.mxu0 0.0
    %404 = vmatpush1.msra.mxu0 0.0
    %405 = vmatprep.subr.mxu0 0.0
    %406 = vmatpush1.msra.mxu0 0.0
    %407 = vmatprep.subr.mxu0 0.0
    %408 = vmatpush1.msra.mxu0 0.0
    %409 = vmatprep.subr.mxu0 0.0
    %410 = vmatpush1.msra.mxu0 0.0
    %411 = vmatprep.subr.mxu0 0.0
    %412 = vmatpush1.msra.mxu0 0.0
    %413 = vmatprep.subr.mxu0 0.0
    %414 = vmatpush1.msra.mxu0 0.0
    %415 = vmatprep.subr.mxu0 0.0
    %416 = vmatpush1.msra.mxu0 0.0
    %417 = vmatprep.subr.mxu0 0.0
    %418 = vmatpush1.msra.mxu0 0.0
    %419 = vmatprep.subr.mxu0 0.0
    %420 = vmatpush1.msra.mxu0 0.0
    %421 = vmatprep.subr.mxu0 0.0
    %422 = vmatpush1.msra.mxu0 0.0
    %423 = vmatprep.subr.mxu0 0.0
    %424 = vmatpush1.msra.mxu0 0.0
    %425 = vmatprep.subr.mxu0 0.0
    %426 = vmatpush1.msra.mxu0 0.0
    %427 = vmatprep.subr.mxu0 0.0
    %428 = vmatpush1.msra.mxu0 0.0
    %429 = vmatprep.subr.mxu0 0.0
    %430 = vmatpush1.msra.mxu0 0.0
    %431 = vmatprep.subr.mxu0 0.0
    %432 = vmatpush1.msra.mxu0 0.0
    %433 = vmatprep.subr.mxu0 0.0
    %434 = vmatpush1.msra.mxu0 0.0
    %435 = vmatprep.subr.mxu0 0.0
    %436 = vmatpush1.msra.mxu0 0.0
    %437 = vmatprep.subr.mxu0 0.0
    %438 = vmatpush1.msra.mxu0 0.0
    %439 = vmatprep.subr.mxu0 0.0
    %440 = vmatpush1.msra.mxu0 0.0
    %441 = vmatprep.mubr.f32.mxu0 0.0
    %442 = vmatmul.mubr.f32.gmra.mrb[0].mxu0 %v280
    %v443 = vpop.f32.mrb[0].mxu0
    %v444 = vadd.f32 0.0, %v443
    %v445 = vpop.f32.mrb[0].mxu0
    %446 = vdwg.mxu0
    %448 = vrot.lane.b32.xlu0 %v376, 64
    %v449 = vpop.permute.xlu0 %448
    %v450 = vsel %vm175, %v449, 0
    %452 = vmatprep.subr.mxu0 0.0
    %453 = vmatpush1.msra.mxu0 %v263
    %454 = vmatprep.subr.mxu0 0.0
    %455 = vmatpush1.msra.mxu0 %v264
    %456 = vmatprep.subr.mxu0 0.0
    %457 = vmatpush1.msra.mxu0 %v265
    %458 = vmatprep.subr.mxu0 0.0
    %459 = vmatpush1.msra.mxu0 %v266
    %460 = vmatprep.subr.mxu0 0.0
    %461 = vmatpush1.msra.mxu0 0.0
    %462 = vmatprep.subr.mxu0 0.0
    %463 = vmatpush1.msra.mxu0 0.0
    %464 = vmatprep.subr.mxu0 0.0
    %465 = vmatpush1.msra.mxu0 0.0
    %466 = vmatprep.subr.mxu0 0.0
    %467 = vmatpush1.msra.mxu0 0.0
    %468 = vmatprep.subr.mxu0 0.0
    %469 = vmatpush1.msra.mxu0 0.0
    %470 = vmatprep.subr.mxu0 0.0
    %471 = vmatpush1.msra.mxu0 0.0
    %472 = vmatprep.subr.mxu0 0.0
    %473 = vmatpush1.msra.mxu0 0.0
    %474 = vmatprep.subr.mxu0 0.0
    %475 = vmatpush1.msra.mxu0 0.0
    %476 = vmatprep.subr.mxu0 0.0
    %477 = vmatpush1.msra.mxu0 0.0
    %478 = vmatprep.subr.mxu0 0.0
    %479 = vmatpush1.msra.mxu0 0.0
    %480 = vmatprep.subr.mxu0 0.0
    %481 = vmatpush1.msra.mxu0 0.0
    %482 = vmatprep.subr.mxu0 0.0
    %483 = vmatpush1.msra.mxu0 0.0
    %484 = vmatprep.subr.mxu0 0.0
    %485 = vmatpush1.msra.mxu0 0.0
    %486 = vmatprep.subr.mxu0 0.0
    %487 = vmatpush1.msra.mxu0 0.0
    %488 = vmatprep.subr.mxu0 0.0
    %489 = vmatpush1.msra.mxu0 0.0
    %490 = vmatprep.subr.mxu0 0.0
    %491 = vmatpush1.msra.mxu0 0.0
    %492 = vmatprep.subr.mxu0 0.0
    %493 = vmatpush1.msra.mxu0 0.0
    %494 = vmatprep.subr.mxu0 0.0
    %495 = vmatpush1.msra.mxu0 0.0
    %496 = vmatprep.subr.mxu0 0.0
    %497 = vmatpush1.msra.mxu0 0.0
    %498 = vmatprep.subr.mxu0 0.0
    %499 = vmatpush1.msra.mxu0 0.0
    %500 = vmatprep.subr.mxu0 0.0
    %501 = vmatpush1.msra.mxu0 0.0
    %502 = vmatprep.subr.mxu0 0.0
    %503 = vmatpush1.msra.mxu0 0.0
    %504 = vmatprep.subr.mxu0 0.0
    %505 = vmatpush1.msra.mxu0 0.0
    %506 = vmatprep.subr.mxu0 0.0
    %507 = vmatpush1.msra.mxu0 0.0
    %508 = vmatprep.subr.mxu0 0.0
    %509 = vmatpush1.msra.mxu0 0.0
    %510 = vmatprep.subr.mxu0 0.0
    %511 = vmatpush1.msra.mxu0 0.0
    %512 = vmatprep.subr.mxu0 0.0
    %513 = vmatpush1.msra.mxu0 0.0
    %514 = vmatprep.subr.mxu0 0.0
    %515 = vmatpush1.msra.mxu0 0.0
    %516 = vmatprep.mubr.f32.mxu0 0.0
    %517 = vmatmul.mubr.f32.gmra.mrb[0].mxu0 %v450
    %v518 = vpop.f32.mrb[0].mxu0
    %v519 = vadd.f32 %v444, %v518
    %v520 = vpop.f32.mrb[0].mxu0
    %521 = vdwg.mxu0
    %v522 = vadd.f32 %v519, %v276
    %v523 = vxor.u32 %v522, 2147483648
    %v524 = vmul.f32 %v523, 1.442695
    %v525 = vpow.pop %v524
    %v526 = vadd.f32 %v525, 1.0
    %v527 = vrcp.pop %v526
    %v528 = vmul.f32 1.0, %v527
    %v529 = vtanh.pop %v522
    %v530 = vmul.f32 %v528, 0.0
    %532 = vrot.lane.b32.xlu0 %v529, 32
    %v533 = vpop.permute.xlu0 %532
    %v535 = vmul.f32 %v528, %v533
    %537 = vrot.lane.b32.xlu0 %v535, 32
    %v538 = vpop.permute.xlu0 %537
    %v540 = vadd.f32 %v530, %v538
    %v541 = vtanh.pop %v540
    %543 = vrot.lane.b32.xlu0 %v541, 32
    %v544 = vpop.permute.xlu0 %543
    %v546 = vmul.f32 %v528, %v544
    %v547 = vld [vmem:[#allocation2 + $0x2] sm:$0x3]
    %548 = vmatprep.subr.mxu0 0.0
    %549 = vmatpush1.msra.mxu0 %v259
    %550 = vmatprep.subr.mxu0 0.0
    %551 = vmatpush1.msra.mxu0 %v260
    %552 = vmatprep.subr.mxu0 0.0
    %553 = vmatpush1.msra.mxu0 %v261
    %554 = vmatprep.subr.mxu0 0.0
    %555 = vmatpush1.msra.mxu0 %v262
    %556 = vmatprep.subr.mxu0 0.0
    %557 = vmatpush1.msra.mxu0 0.0
    %558 = vmatprep.subr.mxu0 0.0
    %559 = vmatpush1.msra.mxu0 0.0
    %560 = vmatprep.subr.mxu0 0.0
    %561 = vmatpush1.msra.mxu0 0.0
    %562 = vmatprep.subr.mxu0 0.0
    %563 = vmatpush1.msra.mxu0 0.0
    %564 = vmatprep.subr.mxu0 0.0
    %565 = vmatpush1.msra.mxu0 0.0
    %566 = vmatprep.subr.mxu0 0.0
    %567 = vmatpush1.msra.mxu0 0.0
    %568 = vmatprep.subr.mxu0 0.0
    %569 = vmatpush1.msra.mxu0 0.0
    %570 = vmatprep.subr.mxu0 0.0
    %571 = vmatpush1.msra.mxu0 0.0
    %572 = vmatprep.subr.mxu0 0.0
    %573 = vmatpush1.msra.mxu0 0.0
    %574 = vmatprep.subr.mxu0 0.0
    %575 = vmatpush1.msra.mxu0 0.0
    %576 = vmatprep.subr.mxu0 0.0
    %577 = vmatpush1.msra.mxu0 0.0
    %578 = vmatprep.subr.mxu0 0.0
    %579 = vmatpush1.msra.mxu0 0.0
    %580 = vmatprep.subr.mxu0 0.0
    %581 = vmatpush1.msra.mxu0 0.0
    %582 = vmatprep.subr.mxu0 0.0
    %583 = vmatpush1.msra.mxu0 0.0
    %584 = vmatprep.subr.mxu0 0.0
    %585 = vmatpush1.msra.mxu0 0.0
    %586 = vmatprep.subr.mxu0 0.0
    %587 = vmatpush1.msra.mxu0 0.0
    %588 = vmatprep.subr.mxu0 0.0
    %589 = vmatpush1.msra.mxu0 0.0
    %590 = vmatprep.subr.mxu0 0.0
    %591 = vmatpush1.msra.mxu0 0.0
    %592 = vmatprep.subr.mxu0 0.0
    %593 = vmatpush1.msra.mxu0 0.0
    %594 = vmatprep.subr.mxu0 0.0
    %595 = vmatpush1.msra.mxu0 0.0
    %596 = vmatprep.subr.mxu0 0.0
    %597 = vmatpush1.msra.mxu0 0.0
    %598 = vmatprep.subr.mxu0 0.0
    %599 = vmatpush1.msra.mxu0 0.0
    %600 = vmatprep.subr.mxu0 0.0
    %601 = vmatpush1.msra.mxu0 0.0
    %602 = vmatprep.subr.mxu0 0.0
    %603 = vmatpush1.msra.mxu0 0.0
    %604 = vmatprep.subr.mxu0 0.0
    %605 = vmatpush1.msra.mxu0 0.0
    %606 = vmatprep.subr.mxu0 0.0
    %607 = vmatpush1.msra.mxu0 0.0
    %608 = vmatprep.subr.mxu0 0.0
    %609 = vmatpush1.msra.mxu0 0.0
    %610 = vmatprep.subr.mxu0 0.0
    %611 = vmatpush1.msra.mxu0 0.0
    %612 = vmatprep.mubr.f32.mxu0 0.0
    %613 = vmatmul.mubr.f32.gmra.mrb[0].mxu0 %v450
    %v614 = vpop.f32.mrb[0].mxu0
    %v615 = vadd.f32 0.0, %v614
    %v616 = vpop.f32.mrb[0].mxu0
    %617 = vdwg.mxu0
    %v618 = vadd.f32 %v547, %v615
    %v619 = vxor.u32 %v618, 2147483648
    %v620 = vmul.f32 %v619, 1.442695
    %v621 = vpow.pop %v620
    %v622 = vadd.f32 %v621, 1.0
    %v623 = vrcp.pop %v622
    %v624 = vmul.f32 1.0, %v623
    %v625 = vtanh.pop %v618
    %v626 = vmul.f32 %v624, %v370
    %628 = vrot.lane.b32.xlu0 %v625, 32
    %v629 = vpop.permute.xlu0 %628
    %v631 = vmul.f32 %v624, %v629
    %633 = vrot.lane.b32.xlu0 %v631, 32
    %v634 = vpop.permute.xlu0 %633
    %v636 = vadd.f32 %v626, %v634
    %v637 = vtanh.pop %v636
    %639 = vrot.lane.b32.xlu0 %v637, 32
    %v640 = vpop.permute.xlu0 %639
    %v642 = vmul.f32 %v624, %v640
    %644 = vrot.lane.b32.xlu0 %v546, 64
    %v645 = vpop.permute.xlu0 %644
    %v646 = vsel %vm175, %v645, 0
    %648 = vmatprep.subr.mxu0 0.0
    %649 = vmatpush1.msra.mxu0 %v267
    %650 = vmatprep.subr.mxu0 0.0
    %651 = vmatpush1.msra.mxu0 %v268
    %652 = vmatprep.subr.mxu0 0.0
    %653 = vmatpush1.msra.mxu0 %v269
    %654 = vmatprep.subr.mxu0 0.0
    %655 = vmatpush1.msra.mxu0 %v270
    %656 = vmatprep.subr.mxu0 0.0
    %657 = vmatpush1.msra.mxu0 0.0
    %658 = vmatprep.subr.mxu0 0.0
    %659 = vmatpush1.msra.mxu0 0.0
    %660 = vmatprep.subr.mxu0 0.0
    %661 = vmatpush1.msra.mxu0 0.0
    %662 = vmatprep.subr.mxu0 0.0
    %663 = vmatpush1.msra.mxu0 0.0
    %664 = vmatprep.subr.mxu0 0.0
    %665 = vmatpush1.msra.mxu0 0.0
    %666 = vmatprep.subr.mxu0 0.0
    %667 = vmatpush1.msra.mxu0 0.0
    %668 = vmatprep.subr.mxu0 0.0
    %669 = vmatpush1.msra.mxu0 0.0
    %670 = vmatprep.subr.mxu0 0.0
    %671 = vmatpush1.msra.mxu0 0.0
    %672 = vmatprep.subr.mxu0 0.0
    %673 = vmatpush1.msra.mxu0 0.0
    %674 = vmatprep.subr.mxu0 0.0
    %675 = vmatpush1.msra.mxu0 0.0
    %676 = vmatprep.subr.mxu0 0.0
    %677 = vmatpush1.msra.mxu0 0.0
    %678 = vmatprep.subr.mxu0 0.0
    %679 = vmatpush1.msra.mxu0 0.0
    %680 = vmatprep.subr.mxu0 0.0
    %681 = vmatpush1.msra.mxu0 0.0
    %682 = vmatprep.subr.mxu0 0.0
    %683 = vmatpush1.msra.mxu0 0.0
    %684 = vmatprep.subr.mxu0 0.0
    %685 = vmatpush1.msra.mxu0 0.0
    %686 = vmatprep.subr.mxu0 0.0
    %687 = vmatpush1.msra.mxu0 0.0
    %688 = vmatprep.subr.mxu0 0.0
    %689 = vmatpush1.msra.mxu0 0.0
    %690 = vmatprep.subr.mxu0 0.0
    %691 = vmatpush1.msra.mxu0 0.0
    %692 = vmatprep.subr.mxu0 0.0
    %693 = vmatpush1.msra.mxu0 0.0
    %694 = vmatprep.subr.mxu0 0.0
    %695 = vmatpush1.msra.mxu0 0.0
    %696 = vmatprep.subr.mxu0 0.0
    %697 = vmatpush1.msra.mxu0 0.0
    %698 = vmatprep.subr.mxu0 0.0
    %699 = vmatpush1.msra.mxu0 0.0
    %700 = vmatprep.subr.mxu0 0.0
    %701 = vmatpush1.msra.mxu0 0.0
    %702 = vmatprep.subr.mxu0 0.0
    %703 = vmatpush1.msra.mxu0 0.0
    %704 = vmatprep.subr.mxu0 0.0
    %705 = vmatpush1.msra.mxu0 0.0
    %706 = vmatprep.subr.mxu0 0.0
    %707 = vmatpush1.msra.mxu0 0.0
    %708 = vmatprep.subr.mxu0 0.0
    %709 = vmatpush1.msra.mxu0 0.0
    %710 = vmatprep.subr.mxu0 0.0
    %711 = vmatpush1.msra.mxu0 0.0
    %712 = vmatprep.mubr.f32.mxu0 0.0
    %713 = vmatmul.mubr.f32.gmra.mrb[0].mxu0 %v646
    %v714 = vpop.f32.mrb[0].mxu0
    %v715 = vadd.f32 0.0, %v714
    %v716 = vpop.f32.mrb[0].mxu0
    %717 = vdwg.mxu0
    %719 = vrot.lane.b32.xlu0 %v642, 64
    %v720 = vpop.permute.xlu0 %719
    %v721 = vsel %vm175, %v720, 0
    %723 = vmatprep.subr.mxu0 0.0
    %724 = vmatpush1.msra.mxu0 %v263
    %725 = vmatprep.subr.mxu0 0.0
    %726 = vmatpush1.msra.mxu0 %v264
    %727 = vmatprep.subr.mxu0 0.0
    %728 = vmatpush1.msra.mxu0 %v265
    %729 = vmatprep.subr.mxu0 0.0
    %730 = vmatpush1.msra.mxu0 %v266
    %731 = vmatprep.subr.mxu0 0.0
    %732 = vmatpush1.msra.mxu0 0.0
    %733 = vmatprep.subr.mxu0 0.0
    %734 = vmatpush1.msra.mxu0 0.0
    %735 = vmatprep.subr.mxu0 0.0
    %736 = vmatpush1.msra.mxu0 0.0
    %737 = vmatprep.subr.mxu0 0.0
    %738 = vmatpush1.msra.mxu0 0.0
    %739 = vmatprep.subr.mxu0 0.0
    %740 = vmatpush1.msra.mxu0 0.0
    %741 = vmatprep.subr.mxu0 0.0
    %742 = vmatpush1.msra.mxu0 0.0
    %743 = vmatprep.subr.mxu0 0.0
    %744 = vmatpush1.msra.mxu0 0.0
    %745 = vmatprep.subr.mxu0 0.0
    %746 = vmatpush1.msra.mxu0 0.0
    %747 = vmatprep.subr.mxu0 0.0
    %748 = vmatpush1.msra.mxu0 0.0
    %749 = vmatprep.subr.mxu0 0.0
    %750 = vmatpush1.msra.mxu0 0.0
    %751 = vmatprep.subr.mxu0 0.0
    %752 = vmatpush1.msra.mxu0 0.0
    %753 = vmatprep.subr.mxu0 0.0
    %754 = vmatpush1.msra.mxu0 0.0
    %755 = vmatprep.subr.mxu0 0.0
    %756 = vmatpush1.msra.mxu0 0.0
    %757 = vmatprep.subr.mxu0 0.0
    %758 = vmatpush1.msra.mxu0 0.0
    %759 = vmatprep.subr.mxu0 0.0
    %760 = vmatpush1.msra.mxu0 0.0
    %761 = vmatprep.subr.mxu0 0.0
    %762 = vmatpush1.msra.mxu0 0.0
    %763 = vmatprep.subr.mxu0 0.0
    %764 = vmatpush1.msra.mxu0 0.0
    %765 = vmatprep.subr.mxu0 0.0
    %766 = vmatpush1.msra.mxu0 0.0
    %767 = vmatprep.subr.mxu0 0.0
    %768 = vmatpush1.msra.mxu0 0.0
    %769 = vmatprep.subr.mxu0 0.0
    %770 = vmatpush1.msra.mxu0 0.0
    %771 = vmatprep.subr.mxu0 0.0
    %772 = vmatpush1.msra.mxu0 0.0
    %773 = vmatprep.subr.mxu0 0.0
    %774 = vmatpush1.msra.mxu0 0.0
    %775 = vmatprep.subr.mxu0 0.0
    %776 = vmatpush1.msra.mxu0 0.0
    %777 = vmatprep.subr.mxu0 0.0
    %778 = vmatpush1.msra.mxu0 0.0
    %779 = vmatprep.subr.mxu0 0.0
    %780 = vmatpush1.msra.mxu0 0.0
    %781 = vmatprep.subr.mxu0 0.0
    %782 = vmatpush1.msra.mxu0 0.0
    %783 = vmatprep.subr.mxu0 0.0
    %784 = vmatpush1.msra.mxu0 0.0
    %785 = vmatprep.subr.mxu0 0.0
    %786 = vmatpush1.msra.mxu0 0.0
    %787 = vmatprep.mubr.f32.mxu0 0.0
    %788 = vmatmul.mubr.f32.gmra.mrb[0].mxu0 %v721
    %v789 = vpop.f32.mrb[0].mxu0
    %v790 = vadd.f32 %v715, %v789
    %v791 = vpop.f32.mrb[0].mxu0
    %792 = vdwg.mxu0
    %v793 = vadd.f32 %v790, %v276
    %v794 = vxor.u32 %v793, 2147483648
    %v795 = vmul.f32 %v794, 1.442695
    %v796 = vpow.pop %v795
    %v797 = vadd.f32 %v796, 1.0
    %v798 = vrcp.pop %v797
    %v799 = vmul.f32 1.0, %v798
    %v800 = vtanh.pop %v793
    %v801 = vmul.f32 %v799, %v540
    %803 = vrot.lane.b32.xlu0 %v800, 32
    %v804 = vpop.permute.xlu0 %803
    %v806 = vmul.f32 %v799, %v804
    %808 = vrot.lane.b32.xlu0 %v806, 32
    %v809 = vpop.permute.xlu0 %808
    %v811 = vadd.f32 %v801, %v809
    %v812 = vtanh.pop %v811
    %814 = vrot.lane.b32.xlu0 %v812, 32
    %v815 = vpop.permute.xlu0 %814
    %v817 = vmul.f32 %v799, %v815
    %v818 = vld [vmem:[#allocation2 + $0x4] sm:$0x3]
    %819 = vmatprep.subr.mxu0 0.0
    %820 = vmatpush1.msra.mxu0 %v259
    %821 = vmatprep.subr.mxu0 0.0
    %822 = vmatpush1.msra.mxu0 %v260
    %823 = vmatprep.subr.mxu0 0.0
    %824 = vmatpush1.msra.mxu0 %v261
    %825 = vmatprep.subr.mxu0 0.0
    %826 = vmatpush1.msra.mxu0 %v262
    %827 = vmatprep.subr.mxu0 0.0
    %828 = vmatpush1.msra.mxu0 0.0
    %829 = vmatprep.subr.mxu0 0.0
    %830 = vmatpush1.msra.mxu0 0.0
    %831 = vmatprep.subr.mxu0 0.0
    %832 = vmatpush1.msra.mxu0 0.0
    %833 = vmatprep.subr.mxu0 0.0
    %834 = vmatpush1.msra.mxu0 0.0
    %835 = vmatprep.subr.mxu0 0.0
    %836 = vmatpush1.msra.mxu0 0.0
    %837 = vmatprep.subr.mxu0 0.0
    %838 = vmatpush1.msra.mxu0 0.0
    %839 = vmatprep.subr.mxu0 0.0
    %840 = vmatpush1.msra.mxu0 0.0
    %841 = vmatprep.subr.mxu0 0.0
    %842 = vmatpush1.msra.mxu0 0.0
    %843 = vmatprep.subr.mxu0 0.0
    %844 = vmatpush1.msra.mxu0 0.0
    %845 = vmatprep.subr.mxu0 0.0
    %846 = vmatpush1.msra.mxu0 0.0
    %847 = vmatprep.subr.mxu0 0.0
    %848 = vmatpush1.msra.mxu0 0.0
    %849 = vmatprep.subr.mxu0 0.0
    %850 = vmatpush1.msra.mxu0 0.0
    %851 = vmatprep.subr.mxu0 0.0
    %852 = vmatpush1.msra.mxu0 0.0
    %853 = vmatprep.subr.mxu0 0.0
    %854 = vmatpush1.msra.mxu0 0.0
    %855 = vmatprep.subr.mxu0 0.0
    %856 = vmatpush1.msra.mxu0 0.0
    %857 = vmatprep.subr.mxu0 0.0
    %858 = vmatpush1.msra.mxu0 0.0
    %859 = vmatprep.subr.mxu0 0.0
    %860 = vmatpush1.msra.mxu0 0.0
    %861 = vmatprep.subr.mxu0 0.0
    %862 = vmatpush1.msra.mxu0 0.0
    %863 = vmatprep.subr.mxu0 0.0
    %864 = vmatpush1.msra.mxu0 0.0
    %865 = vmatprep.subr.mxu0 0.0
    %866 = vmatpush1.msra.mxu0 0.0
    %867 = vmatprep.subr.mxu0 0.0
    %868 = vmatpush1.msra.mxu0 0.0
    %869 = vmatprep.subr.mxu0 0.0
    %870 = vmatpush1.msra.mxu0 0.0
    %871 = vmatprep.subr.mxu0 0.0
    %872 = vmatpush1.msra.mxu0 0.0
    %873 = vmatprep.subr.mxu0 0.0
    %874 = vmatpush1.msra.mxu0 0.0
    %875 = vmatprep.subr.mxu0 0.0
    %876 = vmatpush1.msra.mxu0 0.0
    %877 = vmatprep.subr.mxu0 0.0
    %878 = vmatpush1.msra.mxu0 0.0
    %879 = vmatprep.subr.mxu0 0.0
    %880 = vmatpush1.msra.mxu0 0.0
    %881 = vmatprep.subr.mxu0 0.0
    %882 = vmatpush1.msra.mxu0 0.0
    %883 = vmatprep.mubr.f32.mxu0 0.0
    %884 = vmatmul.mubr.f32.gmra.mrb[0].mxu0 %v721
    %v885 = vpop.f32.mrb[0].mxu0
    %v886 = vadd.f32 0.0, %v885
    %v887 = vpop.f32.mrb[0].mxu0
    %888 = vdwg.mxu0
    %v889 = vadd.f32 %v818, %v886
    %v890 = vxor.u32 %v889, 2147483648
    %v891 = vmul.f32 %v890, 1.442695
    %v892 = vpow.pop %v891
    %v893 = vadd.f32 %v892, 1.0
    %v894 = vrcp.pop %v893
    %v895 = vmul.f32 1.0, %v894
    %v896 = vtanh.pop %v889
    %v897 = vmul.f32 %v895, %v636
    %899 = vrot.lane.b32.xlu0 %v896, 32
    %v900 = vpop.permute.xlu0 %899
    %v902 = vmul.f32 %v895, %v900
    %904 = vrot.lane.b32.xlu0 %v902, 32
    %v905 = vpop.permute.xlu0 %904
    %v907 = vadd.f32 %v897, %v905
    %v908 = vtanh.pop %v907
    %910 = vrot.lane.b32.xlu0 %v908, 32
    %v911 = vpop.permute.xlu0 %910
    %v913 = vmul.f32 %v895, %v911
    %915 = vrot.lane.b32.xlu0 %v817, 64
    %v916 = vpop.permute.xlu0 %915
    %v917 = vsel %vm175, %v916, 0
    %919 = vmatprep.subr.mxu0 0.0
    %920 = vmatpush1.msra.mxu0 %v267
    %921 = vmatprep.subr.mxu0 0.0
    %922 = vmatpush1.msra.mxu0 %v268
    %923 = vmatprep.subr.mxu0 0.0
    %924 = vmatpush1.msra.mxu0 %v269
    %925 = vmatprep.subr.mxu0 0.0
    %926 = vmatpush1.msra.mxu0 %v270
    %927 = vmatprep.subr.mxu0 0.0
    %928 = vmatpush1.msra.mxu0 0.0
    %929 = vmatprep.subr.mxu0 0.0
    %930 = vmatpush1.msra.mxu0 0.0
    %931 = vmatprep.subr.mxu0 0.0
    %932 = vmatpush1.msra.mxu0 0.0
    %933 = vmatprep.subr.mxu0 0.0
    %934 = vmatpush1.msra.mxu0 0.0
    %935 = vmatprep.subr.mxu0 0.0
    %936 = vmatpush1.msra.mxu0 0.0
    %937 = vmatprep.subr.mxu0 0.0
    %938 = vmatpush1.msra.mxu0 0.0
    %939 = vmatprep.subr.mxu0 0.0
    %940 = vmatpush1.msra.mxu0 0.0
    %941 = vmatprep.subr.mxu0 0.0
    %942 = vmatpush1.msra.mxu0 0.0
    %943 = vmatprep.subr.mxu0 0.0
    %944 = vmatpush1.msra.mxu0 0.0
    %945 = vmatprep.subr.mxu0 0.0
    %946 = vmatpush1.msra.mxu0 0.0
    %947 = vmatprep.subr.mxu0 0.0
    %948 = vmatpush1.msra.mxu0 0.0
    %949 = vmatprep.subr.mxu0 0.0
    %950 = vmatpush1.msra.mxu0 0.0
    %951 = vmatprep.subr.mxu0 0.0
    %952 = vmatpush1.msra.mxu0 0.0
    %953 = vmatprep.subr.mxu0 0.0
    %954 = vmatpush1.msra.mxu0 0.0
    %955 = vmatprep.subr.mxu0 0.0
    %956 = vmatpush1.msra.mxu0 0.0
    %957 = vmatprep.subr.mxu0 0.0
    %958 = vmatpush1.msra.mxu0 0.0
    %959 = vmatprep.subr.mxu0 0.0
    %960 = vmatpush1.msra.mxu0 0.0
    %961 = vmatprep.subr.mxu0 0.0
    %962 = vmatpush1.msra.mxu0 0.0
    %963 = vmatprep.subr.mxu0 0.0
    %964 = vmatpush1.msra.mxu0 0.0
    %965 = vmatprep.subr.mxu0 0.0
    %966 = vmatpush1.msra.mxu0 0.0
    %967 = vmatprep.subr.mxu0 0.0
    %968 = vmatpush1.msra.mxu0 0.0
    %969 = vmatprep.subr.mxu0 0.0
    %970 = vmatpush1.msra.mxu0 0.0
    %971 = vmatprep.subr.mxu0 0.0
    %972 = vmatpush1.msra.mxu0 0.0
    %973 = vmatprep.subr.mxu0 0.0
    %974 = vmatpush1.msra.mxu0 0.0
    %975 = vmatprep.subr.mxu0 0.0
    %976 = vmatpush1.msra.mxu0 0.0
    %977 = vmatprep.subr.mxu0 0.0
    %978 = vmatpush1.msra.mxu0 0.0
    %979 = vmatprep.subr.mxu0 0.0
    %980 = vmatpush1.msra.mxu0 0.0
    %981 = vmatprep.subr.mxu0 0.0
    %982 = vmatpush1.msra.mxu0 0.0
    %983 = vmatprep.mubr.f32.mxu0 0.0
    %984 = vmatmul.mubr.f32.gmra.mrb[0].mxu0 %v917
    %v985 = vpop.f32.mrb[0].mxu0
    %v986 = vadd.f32 0.0, %v985
    %v987 = vpop.f32.mrb[0].mxu0
    %988 = vdwg.mxu0
    %990 = vrot.lane.b32.xlu0 %v913, 64
    %v991 = vpop.permute.xlu0 %990
    %v992 = vsel %vm175, %v991, 0
    %994 = vmatprep.subr.mxu0 0.0
    %995 = vmatpush1.msra.mxu0 %v263
    %996 = vmatprep.subr.mxu0 0.0
    %997 = vmatpush1.msra.mxu0 %v264
    %998 = vmatprep.subr.mxu0 0.0
    %999 = vmatpush1.msra.mxu0 %v265
    %1000 = vmatprep.subr.mxu0 0.0
    %1001 = vmatpush1.msra.mxu0 %v266
    %1002 = vmatprep.subr.mxu0 0.0
    %1003 = vmatpush1.msra.mxu0 0.0
    %1004 = vmatprep.subr.mxu0 0.0
    %1005 = vmatpush1.msra.mxu0 0.0
    %1006 = vmatprep.subr.mxu0 0.0
    %1007 = vmatpush1.msra.mxu0 0.0
    %1008 = vmatprep.subr.mxu0 0.0
    %1009 = vmatpush1.msra.mxu0 0.0
    %1010 = vmatprep.subr.mxu0 0.0
    %1011 = vmatpush1.msra.mxu0 0.0
    %1012 = vmatprep.subr.mxu0 0.0
    %1013 = vmatpush1.msra.mxu0 0.0
    %1014 = vmatprep.subr.mxu0 0.0
    %1015 = vmatpush1.msra.mxu0 0.0
    %1016 = vmatprep.subr.mxu0 0.0
    %1017 = vmatpush1.msra.mxu0 0.0
    %1018 = vmatprep.subr.mxu0 0.0
    %1019 = vmatpush1.msra.mxu0 0.0
    %1020 = vmatprep.subr.mxu0 0.0
    %1021 = vmatpush1.msra.mxu0 0.0
    %1022 = vmatprep.subr.mxu0 0.0
    %1023 = vmatpush1.msra.mxu0 0.0
    %1024 = vmatprep.subr.mxu0 0.0
    %1025 = vmatpush1.msra.mxu0 0.0
    %1026 = vmatprep.subr.mxu0 0.0
    %1027 = vmatpush1.msra.mxu0 0.0
    %1028 = vmatprep.subr.mxu0 0.0
    %1029 = vmatpush1.msra.mxu0 0.0
    %1030 = vmatprep.subr.mxu0 0.0
    %1031 = vmatpush1.msra.mxu0 0.0
    %1032 = vmatprep.subr.mxu0 0.0
    %1033 = vmatpush1.msra.mxu0 0.0
    %1034 = vmatprep.subr.mxu0 0.0
    %1035 = vmatpush1.msra.mxu0 0.0
    %1036 = vmatprep.subr.mxu0 0.0
    %1037 = vmatpush1.msra.mxu0 0.0
    %1038 = vmatprep.subr.mxu0 0.0
    %1039 = vmatpush1.msra.mxu0 0.0
    %1040 = vmatprep.subr.mxu0 0.0
    %1041 = vmatpush1.msra.mxu0 0.0
    %1042 = vmatprep.subr.mxu0 0.0
    %1043 = vmatpush1.msra.mxu0 0.0
    %1044 = vmatprep.subr.mxu0 0.0
    %1045 = vmatpush1.msra.mxu0 0.0
    %1046 = vmatprep.subr.mxu0 0.0
    %1047 = vmatpush1.msra.mxu0 0.0
    %1048 = vmatprep.subr.mxu0 0.0
    %1049 = vmatpush1.msra.mxu0 0.0
    %1050 = vmatprep.subr.mxu0 0.0
    %1051 = vmatpush1.msra.mxu0 0.0
    %1052 = vmatprep.subr.mxu0 0.0
    %1053 = vmatpush1.msra.mxu0 0.0
    %1054 = vmatprep.subr.mxu0 0.0
    %1055 = vmatpush1.msra.mxu0 0.0
    %1056 = vmatprep.subr.mxu0 0.0
    %1057 = vmatpush1.msra.mxu0 0.0
    %1058 = vmatprep.mubr.f32.mxu0 0.0
    %1059 = vmatmul.mubr.f32.gmra.mrb[0].mxu0 %v992
    %v1060 = vpop.f32.mrb[0].mxu0
    %v1061 = vadd.f32 %v986, %v1060
    %v1062 = vpop.f32.mrb[0].mxu0
    %1063 = vdwg.mxu0
    %v1064 = vadd.f32 %v1061, %v276
    %v1065 = vxor.u32 %v1064, 2147483648
    %v1066 = vmul.f32 %v1065, 1.442695
    %v1067 = vpow.pop %v1066
    %v1068 = vadd.f32 %v1067, 1.0
    %v1069 = vrcp.pop %v1068
    %v1070 = vmul.f32 1.0, %v1069
    %v1071 = vtanh.pop %v1064
    %v1072 = vmul.f32 %v1070, %v811
    %1074 = vrot.lane.b32.xlu0 %v1071, 32
    %v1075 = vpop.permute.xlu0 %1074
    %v1077 = vmul.f32 %v1070, %v1075
    %1079 = vrot.lane.b32.xlu0 %v1077, 32
    %v1080 = vpop.permute.xlu0 %1079
    %v1082 = vadd.f32 %v1072, %v1080
    %v1083 = vtanh.pop %v1082
    %1085 = vrot.lane.b32.xlu0 %v1083, 32
    %v1086 = vpop.permute.xlu0 %1085
    %v1088 = vmul.f32 %v1070, %v1086
    %v1089 = vld [vmem:[#allocation2 + $0x6] sm:$0x3]
    %1090 = vmatprep.subr.mxu0 0.0
    %1091 = vmatpush1.msra.mxu0 %v259
    %1092 = vmatprep.subr.mxu0 0.0
    %1093 = vmatpush1.msra.mxu0 %v260
    %1094 = vmatprep.subr.mxu0 0.0
    %1095 = vmatpush1.msra.mxu0 %v261
    %1096 = vmatprep.subr.mxu0 0.0
    %1097 = vmatpush1.msra.mxu0 %v262
    %1098 = vmatprep.subr.mxu0 0.0
    %1099 = vmatpush1.msra.mxu0 0.0
    %1100 = vmatprep.subr.mxu0 0.0
    %1101 = vmatpush1.msra.mxu0 0.0
    %1102 = vmatprep.subr.mxu0 0.0
    %1103 = vmatpush1.msra.mxu0 0.0
    %1104 = vmatprep.subr.mxu0 0.0
    %1105 = vmatpush1.msra.mxu0 0.0
    %1106 = vmatprep.subr.mxu0 0.0
    %1107 = vmatpush1.msra.mxu0 0.0
    %1108 = vmatprep.subr.mxu0 0.0
    %1109 = vmatpush1.msra.mxu0 0.0
    %1110 = vmatprep.subr.mxu0 0.0
    %1111 = vmatpush1.msra.mxu0 0.0
    %1112 = vmatprep.subr.mxu0 0.0
    %1113 = vmatpush1.msra.mxu0 0.0
    %1114 = vmatprep.subr.mxu0 0.0
    %1115 = vmatpush1.msra.mxu0 0.0
    %1116 = vmatprep.subr.mxu0 0.0
    %1117 = vmatpush1.msra.mxu0 0.0
    %1118 = vmatprep.subr.mxu0 0.0
    %1119 = vmatpush1.msra.mxu0 0.0
    %1120 = vmatprep.subr.mxu0 0.0
    %1121 = vmatpush1.msra.mxu0 0.0
    %1122 = vmatprep.subr.mxu0 0.0
    %1123 = vmatpush1.msra.mxu0 0.0
    %1124 = vmatprep.subr.mxu0 0.0
    %1125 = vmatpush1.msra.mxu0 0.0
    %1126 = vmatprep.subr.mxu0 0.0
    %1127 = vmatpush1.msra.mxu0 0.0
    %1128 = vmatprep.subr.mxu0 0.0
    %1129 = vmatpush1.msra.mxu0 0.0
    %1130 = vmatprep.subr.mxu0 0.0
    %1131 = vmatpush1.msra.mxu0 0.0
    %1132 = vmatprep.subr.mxu0 0.0
    %1133 = vmatpush1.msra.mxu0 0.0
    %1134 = vmatprep.subr.mxu0 0.0
    %1135 = vmatpush1.msra.mxu0 0.0
    %1136 = vmatprep.subr.mxu0 0.0
    %1137 = vmatpush1.msra.mxu0 0.0
    %1138 = vmatprep.subr.mxu0 0.0
    %1139 = vmatpush1.msra.mxu0 0.0
    %1140 = vmatprep.subr.mxu0 0.0
    %1141 = vmatpush1.msra.mxu0 0.0
    %1142 = vmatprep.subr.mxu0 0.0
    %1143 = vmatpush1.msra.mxu0 0.0
    %1144 = vmatprep.subr.mxu0 0.0
    %1145 = vmatpush1.msra.mxu0 0.0
    %1146 = vmatprep.subr.mxu0 0.0
    %1147 = vmatpush1.msra.mxu0 0.0
    %1148 = vmatprep.subr.mxu0 0.0
    %1149 = vmatpush1.msra.mxu0 0.0
    %1150 = vmatprep.subr.mxu0 0.0
    %1151 = vmatpush1.msra.mxu0 0.0
    %1152 = vmatprep.subr.mxu0 0.0
    %1153 = vmatpush1.msra.mxu0 0.0
    %1154 = vmatprep.mubr.f32.mxu0 0.0
    %1155 = vmatmul.mubr.f32.gmra.mrb[0].mxu0 %v992
    %v1156 = vpop.f32.mrb[0].mxu0
    %v1157 = vadd.f32 0.0, %v1156
    %v1158 = vpop.f32.mrb[0].mxu0
    %1159 = vdwg.mxu0
    %v1160 = vadd.f32 %v1089, %v1157
    %v1161 = vxor.u32 %v1160, 2147483648
    %v1162 = vmul.f32 %v1161, 1.442695
    %v1163 = vpow.pop %v1162
    %v1164 = vadd.f32 %v1163, 1.0
    %v1165 = vrcp.pop %v1164
    %v1166 = vmul.f32 1.0, %v1165
    %v1167 = vtanh.pop %v1160
    %v1168 = vmul.f32 %v1166, %v907
    %1170 = vrot.lane.b32.xlu0 %v1167, 32
    %v1171 = vpop.permute.xlu0 %1170
    %v1173 = vmul.f32 %v1166, %v1171
    %1175 = vrot.lane.b32.xlu0 %v1173, 32
    %v1176 = vpop.permute.xlu0 %1175
    %v1178 = vadd.f32 %v1168, %v1176
    %v1179 = vtanh.pop %v1178
    %1181 = vrot.lane.b32.xlu0 %v1179, 32
    %v1182 = vpop.permute.xlu0 %1181
    %v1184 = vmul.f32 %v1166, %v1182
    %1186 = vrot.lane.b32.xlu0 %v1088, 64
    %v1187 = vpop.permute.xlu0 %1186
    %v1188 = vsel %vm175, %v1187, 0
    %1190 = vmatprep.subr.mxu0 0.0
    %1191 = vmatpush1.msra.mxu0 %v267
    %1192 = vmatprep.subr.mxu0 0.0
    %1193 = vmatpush1.msra.mxu0 %v268
    %1194 = vmatprep.subr.mxu0 0.0
    %1195 = vmatpush1.msra.mxu0 %v269
    %1196 = vmatprep.subr.mxu0 0.0
    %1197 = vmatpush1.msra.mxu0 %v270
    %1198 = vmatprep.subr.mxu0 0.0
    %1199 = vmatpush1.msra.mxu0 0.0
    %1200 = vmatprep.subr.mxu0 0.0
    %1201 = vmatpush1.msra.mxu0 0.0
    %1202 = vmatprep.subr.mxu0 0.0
    %1203 = vmatpush1.msra.mxu0 0.0
    %1204 = vmatprep.subr.mxu0 0.0
    %1205 = vmatpush1.msra.mxu0 0.0
    %1206 = vmatprep.subr.mxu0 0.0
    %1207 = vmatpush1.msra.mxu0 0.0
    %1208 = vmatprep.subr.mxu0 0.0
    %1209 = vmatpush1.msra.mxu0 0.0
    %1210 = vmatprep.subr.mxu0 0.0
    %1211 = vmatpush1.msra.mxu0 0.0
    %1212 = vmatprep.subr.mxu0 0.0
    %1213 = vmatpush1.msra.mxu0 0.0
    %1214 = vmatprep.subr.mxu0 0.0
    %1215 = vmatpush1.msra.mxu0 0.0
    %1216 = vmatprep.subr.mxu0 0.0
    %1217 = vmatpush1.msra.mxu0 0.0
    %1218 = vmatprep.subr.mxu0 0.0
    %1219 = vmatpush1.msra.mxu0 0.0
    %1220 = vmatprep.subr.mxu0 0.0
    %1221 = vmatpush1.msra.mxu0 0.0
    %1222 = vmatprep.subr.mxu0 0.0
    %1223 = vmatpush1.msra.mxu0 0.0
    %1224 = vmatprep.subr.mxu0 0.0
    %1225 = vmatpush1.msra.mxu0 0.0
    %1226 = vmatprep.subr.mxu0 0.0
    %1227 = vmatpush1.msra.mxu0 0.0
    %1228 = vmatprep.subr.mxu0 0.0
    %1229 = vmatpush1.msra.mxu0 0.0
    %1230 = vmatprep.subr.mxu0 0.0
    %1231 = vmatpush1.msra.mxu0 0.0
    %1232 = vmatprep.subr.mxu0 0.0
    %1233 = vmatpush1.msra.mxu0 0.0
    %1234 = vmatprep.subr.mxu0 0.0
    %1235 = vmatpush1.msra.mxu0 0.0
    %1236 = vmatprep.subr.mxu0 0.0
    %1237 = vmatpush1.msra.mxu0 0.0
    %1238 = vmatprep.subr.mxu0 0.0
    %1239 = vmatpush1.msra.mxu0 0.0
    %1240 = vmatprep.subr.mxu0 0.0
    %1241 = vmatpush1.msra.mxu0 0.0
    %1242 = vmatprep.subr.mxu0 0.0
    %1243 = vmatpush1.msra.mxu0 0.0
    %1244 = vmatprep.subr.mxu0 0.0
    %1245 = vmatpush1.msra.mxu0 0.0
    %1246 = vmatprep.subr.mxu0 0.0
    %1247 = vmatpush1.msra.mxu0 0.0
    %1248 = vmatprep.subr.mxu0 0.0
    %1249 = vmatpush1.msra.mxu0 0.0
    %1250 = vmatprep.subr.mxu0 0.0
    %1251 = vmatpush1.msra.mxu0 0.0
    %1252 = vmatprep.subr.mxu0 0.0
    %1253 = vmatpush1.msra.mxu0 0.0
    %1254 = vmatprep.mubr.f32.mxu0 0.0
    %1255 = vmatmul.mubr.f32.gmra.mrb[0].mxu0 %v1188
    %v1256 = vpop.f32.mrb[0].mxu0
    %v1257 = vadd.f32 0.0, %v1256
    %v1258 = vpop.f32.mrb[0].mxu0
    %1259 = vdwg.mxu0
    %1261 = vrot.lane.b32.xlu0 %v1184, 64
    %v1262 = vpop.permute.xlu0 %1261
    %v1263 = vsel %vm175, %v1262, 0
    %1265 = vmatprep.subr.mxu0 0.0
    %1266 = vmatpush1.msra.mxu0 %v263
    %1267 = vmatprep.subr.mxu0 0.0
    %1268 = vmatpush1.msra.mxu0 %v264
    %1269 = vmatprep.subr.mxu0 0.0
    %1270 = vmatpush1.msra.mxu0 %v265
    %1271 = vmatprep.subr.mxu0 0.0
    %1272 = vmatpush1.msra.mxu0 %v266
    %1273 = vmatprep.subr.mxu0 0.0
    %1274 = vmatpush1.msra.mxu0 0.0
    %1275 = vmatprep.subr.mxu0 0.0
    %1276 = vmatpush1.msra.mxu0 0.0
    %1277 = vmatprep.subr.mxu0 0.0
    %1278 = vmatpush1.msra.mxu0 0.0
    %1279 = vmatprep.subr.mxu0 0.0
    %1280 = vmatpush1.msra.mxu0 0.0
    %1281 = vmatprep.subr.mxu0 0.0
    %1282 = vmatpush1.msra.mxu0 0.0
    %1283 = vmatprep.subr.mxu0 0.0
    %1284 = vmatpush1.msra.mxu0 0.0
    %1285 = vmatprep.subr.mxu0 0.0
    %1286 = vmatpush1.msra.mxu0 0.0
    %1287 = vmatprep.subr.mxu0 0.0
    %1288 = vmatpush1.msra.mxu0 0.0
    %1289 = vmatprep.subr.mxu0 0.0
    %1290 = vmatpush1.msra.mxu0 0.0
    %1291 = vmatprep.subr.mxu0 0.0
    %1292 = vmatpush1.msra.mxu0 0.0
    %1293 = vmatprep.subr.mxu0 0.0
    %1294 = vmatpush1.msra.mxu0 0.0
    %1295 = vmatprep.subr.mxu0 0.0
    %1296 = vmatpush1.msra.mxu0 0.0
    %1297 = vmatprep.subr.mxu0 0.0
    %1298 = vmatpush1.msra.mxu0 0.0
    %1299 = vmatprep.subr.mxu0 0.0
    %1300 = vmatpush1.msra.mxu0 0.0
    %1301 = vmatprep.subr.mxu0 0.0
    %1302 = vmatpush1.msra.mxu0 0.0
    %1303 = vmatprep.subr.mxu0 0.0
    %1304 = vmatpush1.msra.mxu0 0.0
    %1305 = vmatprep.subr.mxu0 0.0
    %1306 = vmatpush1.msra.mxu0 0.0
    %1307 = vmatprep.subr.mxu0 0.0
    %1308 = vmatpush1.msra.mxu0 0.0
    %1309 = vmatprep.subr.mxu0 0.0
    %1310 = vmatpush1.msra.mxu0 0.0
    %1311 = vmatprep.subr.mxu0 0.0
    %1312 = vmatpush1.msra.mxu0 0.0
    %1313 = vmatprep.subr.mxu0 0.0
    %1314 = vmatpush1.msra.mxu0 0.0
    %1315 = vmatprep.subr.mxu0 0.0
    %1316 = vmatpush1.msra.mxu0 0.0
    %1317 = vmatprep.subr.mxu0 0.0
    %1318 = vmatpush1.msra.mxu0 0.0
    %1319 = vmatprep.subr.mxu0 0.0
    %1320 = vmatpush1.msra.mxu0 0.0
    %1321 = vmatprep.subr.mxu0 0.0
    %1322 = vmatpush1.msra.mxu0 0.0
    %1323 = vmatprep.subr.mxu0 0.0
    %1324 = vmatpush1.msra.mxu0 0.0
    %1325 = vmatprep.subr.mxu0 0.0
    %1326 = vmatpush1.msra.mxu0 0.0
    %1327 = vmatprep.subr.mxu0 0.0
    %1328 = vmatpush1.msra.mxu0 0.0
    %1329 = vmatprep.mubr.f32.mxu0 0.0
    %1330 = vmatmul.mubr.f32.gmra.mrb[0].mxu0 %v1263
    %v1331 = vpop.f32.mrb[0].mxu0
    %v1332 = vadd.f32 %v1257, %v1331
    %v1333 = vpop.f32.mrb[0].mxu0
    %1334 = vdwg.mxu0
    %v1335 = vadd.f32 %v1332, %v276
    %v1336 = vxor.u32 %v1335, 2147483648
    %v1337 = vmul.f32 %v1336, 1.442695
    %v1338 = vpow.pop %v1337
    %v1339 = vadd.f32 %v1338, 1.0
    %v1340 = vrcp.pop %v1339
    %v1341 = vmul.f32 1.0, %v1340
    %v1342 = vtanh.pop %v1335
    %v1343 = vmul.f32 %v1341, %v1082
    %1345 = vrot.lane.b32.xlu0 %v1342, 32
    %v1346 = vpop.permute.xlu0 %1345
    %v1348 = vmul.f32 %v1341, %v1346
    %1350 = vrot.lane.b32.xlu0 %v1348, 32
    %v1351 = vpop.permute.xlu0 %1350
    %v1353 = vadd.f32 %v1343, %v1351
    %v1354 = vtanh.pop %v1353
    %1356 = vrot.lane.b32.xlu0 %v1354, 32
    %v1357 = vpop.permute.xlu0 %1356
    %v1359 = vmul.f32 %v1341, %v1357
    %v1360 = vld [vmem:[#allocation2 + $0x8] sm:$0x3]
    %1361 = vmatprep.subr.mxu0 0.0
    %1362 = vmatpush1.msra.mxu0 %v259
    %1363 = vmatprep.subr.mxu0 0.0
    %1364 = vmatpush1.msra.mxu0 %v260
    %1365 = vmatprep.subr.mxu0 0.0
    %1366 = vmatpush1.msra.mxu0 %v261
    %1367 = vmatprep.subr.mxu0 0.0
    %1368 = vmatpush1.msra.mxu0 %v262
    %1369 = vmatprep.subr.mxu0 0.0
    %1370 = vmatpush1.msra.mxu0 0.0
    %1371 = vmatprep.subr.mxu0 0.0
    %1372 = vmatpush1.msra.mxu0 0.0
    %1373 = vmatprep.subr.mxu0 0.0
    %1374 = vmatpush1.msra.mxu0 0.0
    %1375 = vmatprep.subr.mxu0 0.0
    %1376 = vmatpush1.msra.mxu0 0.0
    %1377 = vmatprep.subr.mxu0 0.0
    %1378 = vmatpush1.msra.mxu0 0.0
    %1379 = vmatprep.subr.mxu0 0.0
    %1380 = vmatpush1.msra.mxu0 0.0
    %1381 = vmatprep.subr.mxu0 0.0
    %1382 = vmatpush1.msra.mxu0 0.0
    %1383 = vmatprep.subr.mxu0 0.0
    %1384 = vmatpush1.msra.mxu0 0.0
    %1385 = vmatprep.subr.mxu0 0.0
    %1386 = vmatpush1.msra.mxu0 0.0
    %1387 = vmatprep.subr.mxu0 0.0
    %1388 = vmatpush1.msra.mxu0 0.0
    %1389 = vmatprep.subr.mxu0 0.0
    %1390 = vmatpush1.msra.mxu0 0.0
    %1391 = vmatprep.subr.mxu0 0.0
    %1392 = vmatpush1.msra.mxu0 0.0
    %1393 = vmatprep.subr.mxu0 0.0
    %1394 = vmatpush1.msra.mxu0 0.0
    %1395 = vmatprep.subr.mxu0 0.0
    %1396 = vmatpush1.msra.mxu0 0.0
    %1397 = vmatprep.subr.mxu0 0.0
    %1398 = vmatpush1.msra.mxu0 0.0
    %1399 = vmatprep.subr.mxu0 0.0
    %1400 = vmatpush1.msra.mxu0 0.0
    %1401 = vmatprep.subr.mxu0 0.0
    %1402 = vmatpush1.msra.mxu0 0.0
    %1403 = vmatprep.subr.mxu0 0.0
    %1404 = vmatpush1.msra.mxu0 0.0
    %1405 = vmatprep.subr.mxu0 0.0
    %1406 = vmatpush1.msra.mxu0 0.0
    %1407 = vmatprep.subr.mxu0 0.0
    %1408 = vmatpush1.msra.mxu0 0.0
    %1409 = vmatprep.subr.mxu0 0.0
    %1410 = vmatpush1.msra.mxu0 0.0
    %1411 = vmatprep.subr.mxu0 0.0
    %1412 = vmatpush1.msra.mxu0 0.0
    %1413 = vmatprep.subr.mxu0 0.0
    %1414 = vmatpush1.msra.mxu0 0.0
    %1415 = vmatprep.subr.mxu0 0.0
    %1416 = vmatpush1.msra.mxu0 0.0
    %1417 = vmatprep.subr.mxu0 0.0
    %1418 = vmatpush1.msra.mxu0 0.0
    %1419 = vmatprep.subr.mxu0 0.0
    %1420 = vmatpush1.msra.mxu0 0.0
    %1421 = vmatprep.subr.mxu0 0.0
    %1422 = vmatpush1.msra.mxu0 0.0
    %1423 = vmatprep.subr.mxu0 0.0
    %1424 = vmatpush1.msra.mxu0 0.0
    %1425 = vmatprep.mubr.f32.mxu0 0.0
    %1426 = vmatmul.mubr.f32.gmra.mrb[0].mxu0 %v1263
    %v1427 = vpop.f32.mrb[0].mxu0
    %v1428 = vadd.f32 0.0, %v1427
    %v1429 = vpop.f32.mrb[0].mxu0
    %1430 = vdwg.mxu0
    %v1431 = vadd.f32 %v1360, %v1428
    %v1432 = vxor.u32 %v1431, 2147483648
    %v1433 = vmul.f32 %v1432, 1.442695
    %v1434 = vpow.pop %v1433
    %v1435 = vadd.f32 %v1434, 1.0
    %v1436 = vrcp.pop %v1435
    %v1437 = vmul.f32 1.0, %v1436
    %v1438 = vtanh.pop %v1431
    %v1439 = vmul.f32 %v1437, %v1178
    %1441 = vrot.lane.b32.xlu0 %v1438, 32
    %v1442 = vpop.permute.xlu0 %1441
    %v1444 = vmul.f32 %v1437, %v1442
    %1446 = vrot.lane.b32.xlu0 %v1444, 32
    %v1447 = vpop.permute.xlu0 %1446
    %v1449 = vadd.f32 %v1439, %v1447
    %v1450 = vtanh.pop %v1449
    %1452 = vrot.lane.b32.xlu0 %v1450, 32
    %v1453 = vpop.permute.xlu0 %1452
    %v1455 = vmul.f32 %v1437, %v1453
    %1457 = vrot.lane.b32.xlu0 %v1359, 64
    %v1458 = vpop.permute.xlu0 %1457
    %v1459 = vsel %vm175, %v1458, 0
    %1461 = vmatprep.subr.mxu0 0.0
    %1462 = vmatpush1.msra.mxu0 %v267
    %1463 = vmatprep.subr.mxu0 0.0
    %1464 = vmatpush1.msra.mxu0 %v268
    %1465 = vmatprep.subr.mxu0 0.0
    %1466 = vmatpush1.msra.mxu0 %v269
    %1467 = vmatprep.subr.mxu0 0.0
    %1468 = vmatpush1.msra.mxu0 %v270
    %1469 = vmatprep.subr.mxu0 0.0
    %1470 = vmatpush1.msra.mxu0 0.0
    %1471 = vmatprep.subr.mxu0 0.0
    %1472 = vmatpush1.msra.mxu0 0.0
    %1473 = vmatprep.subr.mxu0 0.0
    %1474 = vmatpush1.msra.mxu0 0.0
    %1475 = vmatprep.subr.mxu0 0.0
    %1476 = vmatpush1.msra.mxu0 0.0
    %1477 = vmatprep.subr.mxu0 0.0
    %1478 = vmatpush1.msra.mxu0 0.0
    %1479 = vmatprep.subr.mxu0 0.0
    %1480 = vmatpush1.msra.mxu0 0.0
    %1481 = vmatprep.subr.mxu0 0.0
    %1482 = vmatpush1.msra.mxu0 0.0
    %1483 = vmatprep.subr.mxu0 0.0
    %1484 = vmatpush1.msra.mxu0 0.0
    %1485 = vmatprep.subr.mxu0 0.0
    %1486 = vmatpush1.msra.mxu0 0.0
    %1487 = vmatprep.subr.mxu0 0.0
    %1488 = vmatpush1.msra.mxu0 0.0
    %1489 = vmatprep.subr.mxu0 0.0
    %1490 = vmatpush1.msra.mxu0 0.0
    %1491 = vmatprep.subr.mxu0 0.0
    %1492 = vmatpush1.msra.mxu0 0.0
    %1493 = vmatprep.subr.mxu0 0.0
    %1494 = vmatpush1.msra.mxu0 0.0
    %1495 = vmatprep.subr.mxu0 0.0
    %1496 = vmatpush1.msra.mxu0 0.0
    %1497 = vmatprep.subr.mxu0 0.0
    %1498 = vmatpush1.msra.mxu0 0.0
    %1499 = vmatprep.subr.mxu0 0.0
    %1500 = vmatpush1.msra.mxu0 0.0
    %1501 = vmatprep.subr.mxu0 0.0
    %1502 = vmatpush1.msra.mxu0 0.0
    %1503 = vmatprep.subr.mxu0 0.0
    %1504 = vmatpush1.msra.mxu0 0.0
    %1505 = vmatprep.subr.mxu0 0.0
    %1506 = vmatpush1.msra.mxu0 0.0
    %1507 = vmatprep.subr.mxu0 0.0
    %1508 = vmatpush1.msra.mxu0 0.0
    %1509 = vmatprep.subr.mxu0 0.0
    %1510 = vmatpush1.msra.mxu0 0.0
    %1511 = vmatprep.subr.mxu0 0.0
    %1512 = vmatpush1.msra.mxu0 0.0
    %1513 = vmatprep.subr.mxu0 0.0
    %1514 = vmatpush1.msra.mxu0 0.0
    %1515 = vmatprep.subr.mxu0 0.0
    %1516 = vmatpush1.msra.mxu0 0.0
    %1517 = vmatprep.subr.mxu0 0.0
    %1518 = vmatpush1.msra.mxu0 0.0
    %1519 = vmatprep.subr.mxu0 0.0
    %1520 = vmatpush1.msra.mxu0 0.0
    %1521 = vmatprep.subr.mxu0 0.0
    %1522 = vmatpush1.msra.mxu0 0.0
    %1523 = vmatprep.subr.mxu0 0.0
    %1524 = vmatpush1.msra.mxu0 0.0
    %1525 = vmatprep.mubr.f32.mxu0 0.0
    %1526 = vmatmul.mubr.f32.gmra.mrb[0].mxu0 %v1459
    %v1527 = vpop.f32.mrb[0].mxu0
    %v1528 = vadd.f32 0.0, %v1527
    %v1529 = vpop.f32.mrb[0].mxu0
    %1530 = vdwg.mxu0
    %1532 = vrot.lane.b32.xlu0 %v1455, 64
    %v1533 = vpop.permute.xlu0 %1532
    %v1534 = vsel %vm175, %v1533, 0
    %1536 = vmatprep.subr.mxu0 0.0
    %1537 = vmatpush1.msra.mxu0 %v263
    %1538 = vmatprep.subr.mxu0 0.0
    %1539 = vmatpush1.msra.mxu0 %v264
    %1540 = vmatprep.subr.mxu0 0.0
    %1541 = vmatpush1.msra.mxu0 %v265
    %1542 = vmatprep.subr.mxu0 0.0
    %1543 = vmatpush1.msra.mxu0 %v266
    %1544 = vmatprep.subr.mxu0 0.0
    %1545 = vmatpush1.msra.mxu0 0.0
    %1546 = vmatprep.subr.mxu0 0.0
    %1547 = vmatpush1.msra.mxu0 0.0
    %1548 = vmatprep.subr.mxu0 0.0
    %1549 = vmatpush1.msra.mxu0 0.0
    %1550 = vmatprep.subr.mxu0 0.0
    %1551 = vmatpush1.msra.mxu0 0.0
    %1552 = vmatprep.subr.mxu0 0.0
    %1553 = vmatpush1.msra.mxu0 0.0
    %1554 = vmatprep.subr.mxu0 0.0
    %1555 = vmatpush1.msra.mxu0 0.0
    %1556 = vmatprep.subr.mxu0 0.0
    %1557 = vmatpush1.msra.mxu0 0.0
    %1558 = vmatprep.subr.mxu0 0.0
    %1559 = vmatpush1.msra.mxu0 0.0
    %1560 = vmatprep.subr.mxu0 0.0
    %1561 = vmatpush1.msra.mxu0 0.0
    %1562 = vmatprep.subr.mxu0 0.0
    %1563 = vmatpush1.msra.mxu0 0.0
    %1564 = vmatprep.subr.mxu0 0.0
    %1565 = vmatpush1.msra.mxu0 0.0
    %1566 = vmatprep.subr.mxu0 0.0
    %1567 = vmatpush1.msra.mxu0 0.0
    %1568 = vmatprep.subr.mxu0 0.0
    %1569 = vmatpush1.msra.mxu0 0.0
    %1570 = vmatprep.subr.mxu0 0.0
    %1571 = vmatpush1.msra.mxu0 0.0
    %1572 = vmatprep.subr.mxu0 0.0
    %1573 = vmatpush1.msra.mxu0 0.0
    %1574 = vmatprep.subr.mxu0 0.0
    %1575 = vmatpush1.msra.mxu0 0.0
    %1576 = vmatprep.subr.mxu0 0.0
    %1577 = vmatpush1.msra.mxu0 0.0
    %1578 = vmatprep.subr.mxu0 0.0
    %1579 = vmatpush1.msra.mxu0 0.0
    %1580 = vmatprep.subr.mxu0 0.0
    %1581 = vmatpush1.msra.mxu0 0.0
    %1582 = vmatprep.subr.mxu0 0.0
    %1583 = vmatpush1.msra.mxu0 0.0
    %1584 = vmatprep.subr.mxu0 0.0
    %1585 = vmatpush1.msra.mxu0 0.0
    %1586 = vmatprep.subr.mxu0 0.0
    %1587 = vmatpush1.msra.mxu0 0.0
    %1588 = vmatprep.subr.mxu0 0.0
    %1589 = vmatpush1.msra.mxu0 0.0
    %1590 = vmatprep.subr.mxu0 0.0
    %1591 = vmatpush1.msra.mxu0 0.0
    %1592 = vmatprep.subr.mxu0 0.0
    %1593 = vmatpush1.msra.mxu0 0.0
    %1594 = vmatprep.subr.mxu0 0.0
    %1595 = vmatpush1.msra.mxu0 0.0
    %1596 = vmatprep.subr.mxu0 0.0
    %1597 = vmatpush1.msra.mxu0 0.0
    %1598 = vmatprep.subr.mxu0 0.0
    %1599 = vmatpush1.msra.mxu0 0.0
    %1600 = vmatprep.mubr.f32.mxu0 0.0
    %1601 = vmatmul.mubr.f32.gmra.mrb[0].mxu0 %v1534
    %v1602 = vpop.f32.mrb[0].mxu0
    %v1603 = vadd.f32 %v1528, %v1602
    %v1604 = vpop.f32.mrb[0].mxu0
    %1605 = vdwg.mxu0
    %v1606 = vadd.f32 %v1603, %v276
    %v1607 = vxor.u32 %v1606, 2147483648
    %v1608 = vmul.f32 %v1607, 1.442695
    %v1609 = vpow.pop %v1608
    %v1610 = vadd.f32 %v1609, 1.0
    %v1611 = vrcp.pop %v1610
    %v1612 = vmul.f32 1.0, %v1611
    %v1613 = vtanh.pop %v1606
    %v1614 = vmul.f32 %v1612, %v1353
    %1616 = vrot.lane.b32.xlu0 %v1613, 32
    %v1617 = vpop.permute.xlu0 %1616
    %v1619 = vmul.f32 %v1612, %v1617
    %1621 = vrot.lane.b32.xlu0 %v1619, 32
    %v1622 = vpop.permute.xlu0 %1621
    %v1624 = vadd.f32 %v1614, %v1622
    %v1625 = vtanh.pop %v1624
    %1627 = vrot.lane.b32.xlu0 %v1625, 32
    %v1628 = vpop.permute.xlu0 %1627
    %v1630 = vmul.f32 %v1612, %v1628
    %v1631 = vld [vmem:[#allocation2 + $0xa] sm:$0x3]
    %1632 = vmatprep.subr.mxu0 0.0
    %1633 = vmatpush1.msra.mxu0 %v259
    %1634 = vmatprep.subr.mxu0 0.0
    %1635 = vmatpush1.msra.mxu0 %v260
    %1636 = vmatprep.subr.mxu0 0.0
    %1637 = vmatpush1.msra.mxu0 %v261
    %1638 = vmatprep.subr.mxu0 0.0
    %1639 = vmatpush1.msra.mxu0 %v262
    %1640 = vmatprep.subr.mxu0 0.0
    %1641 = vmatpush1.msra.mxu0 0.0
    %1642 = vmatprep.subr.mxu0 0.0
    %1643 = vmatpush1.msra.mxu0 0.0
    %1644 = vmatprep.subr.mxu0 0.0
    %1645 = vmatpush1.msra.mxu0 0.0
    %1646 = vmatprep.subr.mxu0 0.0
    %1647 = vmatpush1.msra.mxu0 0.0
    %1648 = vmatprep.subr.mxu0 0.0
    %1649 = vmatpush1.msra.mxu0 0.0
    %1650 = vmatprep.subr.mxu0 0.0
    %1651 = vmatpush1.msra.mxu0 0.0
    %1652 = vmatprep.subr.mxu0 0.0
    %1653 = vmatpush1.msra.mxu0 0.0
    %1654 = vmatprep.subr.mxu0 0.0
    %1655 = vmatpush1.msra.mxu0 0.0
    %1656 = vmatprep.subr.mxu0 0.0
    %1657 = vmatpush1.msra.mxu0 0.0
    %1658 = vmatprep.subr.mxu0 0.0
    %1659 = vmatpush1.msra.mxu0 0.0
    %1660 = vmatprep.subr.mxu0 0.0
    %1661 = vmatpush1.msra.mxu0 0.0
    %1662 = vmatprep.subr.mxu0 0.0
    %1663 = vmatpush1.msra.mxu0 0.0
    %1664 = vmatprep.subr.mxu0 0.0
    %1665 = vmatpush1.msra.mxu0 0.0
    %1666 = vmatprep.subr.mxu0 0.0
    %1667 = vmatpush1.msra.mxu0 0.0
    %1668 = vmatprep.subr.mxu0 0.0
    %1669 = vmatpush1.msra.mxu0 0.0
    %1670 = vmatprep.subr.mxu0 0.0
    %1671 = vmatpush1.msra.mxu0 0.0
    %1672 = vmatprep.subr.mxu0 0.0
    %1673 = vmatpush1.msra.mxu0 0.0
    %1674 = vmatprep.subr.mxu0 0.0
    %1675 = vmatpush1.msra.mxu0 0.0
    %1676 = vmatprep.subr.mxu0 0.0
    %1677 = vmatpush1.msra.mxu0 0.0
    %1678 = vmatprep.subr.mxu0 0.0
    %1679 = vmatpush1.msra.mxu0 0.0
    %1680 = vmatprep.subr.mxu0 0.0
    %1681 = vmatpush1.msra.mxu0 0.0
    %1682 = vmatprep.subr.mxu0 0.0
    %1683 = vmatpush1.msra.mxu0 0.0
    %1684 = vmatprep.subr.mxu0 0.0
    %1685 = vmatpush1.msra.mxu0 0.0
    %1686 = vmatprep.subr.mxu0 0.0
    %1687 = vmatpush1.msra.mxu0 0.0
    %1688 = vmatprep.subr.mxu0 0.0
    %1689 = vmatpush1.msra.mxu0 0.0
    %1690 = vmatprep.subr.mxu0 0.0
    %1691 = vmatpush1.msra.mxu0 0.0
    %1692 = vmatprep.subr.mxu0 0.0
    %1693 = vmatpush1.msra.mxu0 0.0
    %1694 = vmatprep.subr.mxu0 0.0
    %1695 = vmatpush1.msra.mxu0 0.0
    %1696 = vmatprep.mubr.f32.mxu0 0.0
    %1697 = vmatmul.mubr.f32.gmra.mrb[0].mxu0 %v1534
    %v1698 = vpop.f32.mrb[0].mxu0
    %v1699 = vadd.f32 0.0, %v1698
    %v1700 = vpop.f32.mrb[0].mxu0
    %1701 = vdwg.mxu0
    %v1702 = vadd.f32 %v1631, %v1699
    %v1703 = vxor.u32 %v1702, 2147483648
    %v1704 = vmul.f32 %v1703, 1.442695
    %v1705 = vpow.pop %v1704
    %v1706 = vadd.f32 %v1705, 1.0
    %v1707 = vrcp.pop %v1706
    %v1708 = vmul.f32 1.0, %v1707
    %v1709 = vtanh.pop %v1702
    %v1710 = vmul.f32 %v1708, %v1449
    %1712 = vrot.lane.b32.xlu0 %v1709, 32
    %v1713 = vpop.permute.xlu0 %1712
    %v1715 = vmul.f32 %v1708, %v1713
    %1717 = vrot.lane.b32.xlu0 %v1715, 32
    %v1718 = vpop.permute.xlu0 %1717
    %v1720 = vadd.f32 %v1710, %v1718
    %v1721 = vtanh.pop %v1720
    %1723 = vrot.lane.b32.xlu0 %v1721, 32
    %v1724 = vpop.permute.xlu0 %1723
    %v1726 = vmul.f32 %v1708, %v1724
    %1728 = vrot.lane.b32.xlu0 %v1630, 64
    %v1729 = vpop.permute.xlu0 %1728
    %v1730 = vsel %vm175, %v1729, 0
    %1732 = vmatprep.subr.mxu0 0.0
    %1733 = vmatpush1.msra.mxu0 %v267
    %1734 = vmatprep.subr.mxu0 0.0
    %1735 = vmatpush1.msra.mxu0 %v268
    %1736 = vmatprep.subr.mxu0 0.0
    %1737 = vmatpush1.msra.mxu0 %v269
    %1738 = vmatprep.subr.mxu0 0.0
    %1739 = vmatpush1.msra.mxu0 %v270
    %1740 = vmatprep.subr.mxu0 0.0
    %1741 = vmatpush1.msra.mxu0 0.0
    %1742 = vmatprep.subr.mxu0 0.0
    %1743 = vmatpush1.msra.mxu0 0.0
    %1744 = vmatprep.subr.mxu0 0.0
    %1745 = vmatpush1.msra.mxu0 0.0
    %1746 = vmatprep.subr.mxu0 0.0
    %1747 = vmatpush1.msra.mxu0 0.0
    %1748 = vmatprep.subr.mxu0 0.0
    %1749 = vmatpush1.msra.mxu0 0.0
    %1750 = vmatprep.subr.mxu0 0.0
    %1751 = vmatpush1.msra.mxu0 0.0
    %1752 = vmatprep.subr.mxu0 0.0
    %1753 = vmatpush1.msra.mxu0 0.0
    %1754 = vmatprep.subr.mxu0 0.0
    %1755 = vmatpush1.msra.mxu0 0.0
    %1756 = vmatprep.subr.mxu0 0.0
    %1757 = vmatpush1.msra.mxu0 0.0
    %1758 = vmatprep.subr.mxu0 0.0
    %1759 = vmatpush1.msra.mxu0 0.0
    %1760 = vmatprep.subr.mxu0 0.0
    %1761 = vmatpush1.msra.mxu0 0.0
    %1762 = vmatprep.subr.mxu0 0.0
    %1763 = vmatpush1.msra.mxu0 0.0
    %1764 = vmatprep.subr.mxu0 0.0
    %1765 = vmatpush1.msra.mxu0 0.0
    %1766 = vmatprep.subr.mxu0 0.0
    %1767 = vmatpush1.msra.mxu0 0.0
    %1768 = vmatprep.subr.mxu0 0.0
    %1769 = vmatpush1.msra.mxu0 0.0
    %1770 = vmatprep.subr.mxu0 0.0
    %1771 = vmatpush1.msra.mxu0 0.0
    %1772 = vmatprep.subr.mxu0 0.0
    %1773 = vmatpush1.msra.mxu0 0.0
    %1774 = vmatprep.subr.mxu0 0.0
    %1775 = vmatpush1.msra.mxu0 0.0
    %1776 = vmatprep.subr.mxu0 0.0
    %1777 = vmatpush1.msra.mxu0 0.0
    %1778 = vmatprep.subr.mxu0 0.0
    %1779 = vmatpush1.msra.mxu0 0.0
    %1780 = vmatprep.subr.mxu0 0.0
    %1781 = vmatpush1.msra.mxu0 0.0
    %1782 = vmatprep.subr.mxu0 0.0
    %1783 = vmatpush1.msra.mxu0 0.0
    %1784 = vmatprep.subr.mxu0 0.0
    %1785 = vmatpush1.msra.mxu0 0.0
    %1786 = vmatprep.subr.mxu0 0.0
    %1787 = vmatpush1.msra.mxu0 0.0
    %1788 = vmatprep.subr.mxu0 0.0
    %1789 = vmatpush1.msra.mxu0 0.0
    %1790 = vmatprep.subr.mxu0 0.0
    %1791 = vmatpush1.msra.mxu0 0.0
    %1792 = vmatprep.subr.mxu0 0.0
    %1793 = vmatpush1.msra.mxu0 0.0
    %1794 = vmatprep.subr.mxu0 0.0
    %1795 = vmatpush1.msra.mxu0 0.0
    %1796 = vmatprep.mubr.f32.mxu0 0.0
    %1797 = vmatmul.mubr.f32.gmra.mrb[0].mxu0 %v1730
    %v1798 = vpop.f32.mrb[0].mxu0
    %v1799 = vadd.f32 0.0, %v1798
    %v1800 = vpop.f32.mrb[0].mxu0
    %1801 = vdwg.mxu0
    %1803 = vrot.lane.b32.xlu0 %v1726, 64
    %v1804 = vpop.permute.xlu0 %1803
    %v1805 = vsel %vm175, %v1804, 0
    %1807 = vmatprep.subr.mxu0 0.0
    %1808 = vmatpush1.msra.mxu0 %v263
    %1809 = vmatprep.subr.mxu0 0.0
    %1810 = vmatpush1.msra.mxu0 %v264
    %1811 = vmatprep.subr.mxu0 0.0
    %1812 = vmatpush1.msra.mxu0 %v265
    %1813 = vmatprep.subr.mxu0 0.0
    %1814 = vmatpush1.msra.mxu0 %v266
    %1815 = vmatprep.subr.mxu0 0.0
    %1816 = vmatpush1.msra.mxu0 0.0
    %1817 = vmatprep.subr.mxu0 0.0
    %1818 = vmatpush1.msra.mxu0 0.0
    %1819 = vmatprep.subr.mxu0 0.0
    %1820 = vmatpush1.msra.mxu0 0.0
    %1821 = vmatprep.subr.mxu0 0.0
    %1822 = vmatpush1.msra.mxu0 0.0
    %1823 = vmatprep.subr.mxu0 0.0
    %1824 = vmatpush1.msra.mxu0 0.0
    %1825 = vmatprep.subr.mxu0 0.0
    %1826 = vmatpush1.msra.mxu0 0.0
    %1827 = vmatprep.subr.mxu0 0.0
    %1828 = vmatpush1.msra.mxu0 0.0
    %1829 = vmatprep.subr.mxu0 0.0
    %1830 = vmatpush1.msra.mxu0 0.0
    %1831 = vmatprep.subr.mxu0 0.0
    %1832 = vmatpush1.msra.mxu0 0.0
    %1833 = vmatprep.subr.mxu0 0.0
    %1834 = vmatpush1.msra.mxu0 0.0
    %1835 = vmatprep.subr.mxu0 0.0
    %1836 = vmatpush1.msra.mxu0 0.0
    %1837 = vmatprep.subr.mxu0 0.0
    %1838 = vmatpush1.msra.mxu0 0.0
    %1839 = vmatprep.subr.mxu0 0.0
    %1840 = vmatpush1.msra.mxu0 0.0
    %1841 = vmatprep.subr.mxu0 0.0
    %1842 = vmatpush1.msra.mxu0 0.0
    %1843 = vmatprep.subr.mxu0 0.0
    %1844 = vmatpush1.msra.mxu0 0.0
    %1845 = vmatprep.subr.mxu0 0.0
    %1846 = vmatpush1.msra.mxu0 0.0
    %1847 = vmatprep.subr.mxu0 0.0
    %1848 = vmatpush1.msra.mxu0 0.0
    %1849 = vmatprep.subr.mxu0 0.0
    %1850 = vmatpush1.msra.mxu0 0.0
    %1851 = vmatprep.subr.mxu0 0.0
    %1852 = vmatpush1.msra.mxu0 0.0
    %1853 = vmatprep.subr.mxu0 0.0
    %1854 = vmatpush1.msra.mxu0 0.0
    %1855 = vmatprep.subr.mxu0 0.0
    %1856 = vmatpush1.msra.mxu0 0.0
    %1857 = vmatprep.subr.mxu0 0.0
    %1858 = vmatpush1.msra.mxu0 0.0
    %1859 = vmatprep.subr.mxu0 0.0
    %1860 = vmatpush1.msra.mxu0 0.0
    %1861 = vmatprep.subr.mxu0 0.0
    %1862 = vmatpush1.msra.mxu0 0.0
    %1863 = vmatprep.subr.mxu0 0.0
    %1864 = vmatpush1.msra.mxu0 0.0
    %1865 = vmatprep.subr.mxu0 0.0
    %1866 = vmatpush1.msra.mxu0 0.0
    %1867 = vmatprep.subr.mxu0 0.0
    %1868 = vmatpush1.msra.mxu0 0.0
    %1869 = vmatprep.subr.mxu0 0.0
    %1870 = vmatpush1.msra.mxu0 0.0
    %1871 = vmatprep.mubr.f32.mxu0 0.0
    %1872 = vmatmul.mubr.f32.gmra.mrb[0].mxu0 %v1805
    %v1873 = vpop.f32.mrb[0].mxu0
    %v1874 = vadd.f32 %v1799, %v1873
    %v1875 = vpop.f32.mrb[0].mxu0
    %1876 = vdwg.mxu0
    %v1877 = vadd.f32 %v1874, %v276
    %v1878 = vxor.u32 %v1877, 2147483648
    %v1879 = vmul.f32 %v1878, 1.442695
    %v1880 = vpow.pop %v1879
    %v1881 = vadd.f32 %v1880, 1.0
    %v1882 = vrcp.pop %v1881
    %v1883 = vmul.f32 1.0, %v1882
    %v1884 = vtanh.pop %v1877
    %v1885 = vmul.f32 %v1883, %v1624
    %1887 = vrot.lane.b32.xlu0 %v1884, 32
    %v1888 = vpop.permute.xlu0 %1887
    %v1890 = vmul.f32 %v1883, %v1888
    %1892 = vrot.lane.b32.xlu0 %v1890, 32
    %v1893 = vpop.permute.xlu0 %1892
    %v1895 = vadd.f32 %v1885, %v1893
    %v1896 = vtanh.pop %v1895
    %1898 = vrot.lane.b32.xlu0 %v1896, 32
    %v1899 = vpop.permute.xlu0 %1898
    %v1901 = vmul.f32 %v1883, %v1899
    %v1902 = vld [vmem:[#allocation2 + $0xc] sm:$0x3]
    %1903 = vmatprep.subr.mxu0 0.0
    %1904 = vmatpush1.msra.mxu0 %v259
    %1905 = vmatprep.subr.mxu0 0.0
    %1906 = vmatpush1.msra.mxu0 %v260
    %1907 = vmatprep.subr.mxu0 0.0
    %1908 = vmatpush1.msra.mxu0 %v261
    %1909 = vmatprep.subr.mxu0 0.0
    %1910 = vmatpush1.msra.mxu0 %v262
    %1911 = vmatprep.subr.mxu0 0.0
    %1912 = vmatpush1.msra.mxu0 0.0
    %1913 = vmatprep.subr.mxu0 0.0
    %1914 = vmatpush1.msra.mxu0 0.0
    %1915 = vmatprep.subr.mxu0 0.0
    %1916 = vmatpush1.msra.mxu0 0.0
    %1917 = vmatprep.subr.mxu0 0.0
    %1918 = vmatpush1.msra.mxu0 0.0
    %1919 = vmatprep.subr.mxu0 0.0
    %1920 = vmatpush1.msra.mxu0 0.0
    %1921 = vmatprep.subr.mxu0 0.0
    %1922 = vmatpush1.msra.mxu0 0.0
    %1923 = vmatprep.subr.mxu0 0.0
    %1924 = vmatpush1.msra.mxu0 0.0
    %1925 = vmatprep.subr.mxu0 0.0
    %1926 = vmatpush1.msra.mxu0 0.0
    %1927 = vmatprep.subr.mxu0 0.0
    %1928 = vmatpush1.msra.mxu0 0.0
    %1929 = vmatprep.subr.mxu0 0.0
    %1930 = vmatpush1.msra.mxu0 0.0
    %1931 = vmatprep.subr.mxu0 0.0
    %1932 = vmatpush1.msra.mxu0 0.0
    %1933 = vmatprep.subr.mxu0 0.0
    %1934 = vmatpush1.msra.mxu0 0.0
    %1935 = vmatprep.subr.mxu0 0.0
    %1936 = vmatpush1.msra.mxu0 0.0
    %1937 = vmatprep.subr.mxu0 0.0
    %1938 = vmatpush1.msra.mxu0 0.0
    %1939 = vmatprep.subr.mxu0 0.0
    %1940 = vmatpush1.msra.mxu0 0.0
    %1941 = vmatprep.subr.mxu0 0.0
    %1942 = vmatpush1.msra.mxu0 0.0
    %1943 = vmatprep.subr.mxu0 0.0
    %1944 = vmatpush1.msra.mxu0 0.0
    %1945 = vmatprep.subr.mxu0 0.0
    %1946 = vmatpush1.msra.mxu0 0.0
    %1947 = vmatprep.subr.mxu0 0.0
    %1948 = vmatpush1.msra.mxu0 0.0
    %1949 = vmatprep.subr.mxu0 0.0
    %1950 = vmatpush1.msra.mxu0 0.0
    %1951 = vmatprep.subr.mxu0 0.0
    %1952 = vmatpush1.msra.mxu0 0.0
    %1953 = vmatprep.subr.mxu0 0.0
    %1954 = vmatpush1.msra.mxu0 0.0
    %1955 = vmatprep.subr.mxu0 0.0
    %1956 = vmatpush1.msra.mxu0 0.0
    %1957 = vmatprep.subr.mxu0 0.0
    %1958 = vmatpush1.msra.mxu0 0.0
    %1959 = vmatprep.subr.mxu0 0.0
    %1960 = vmatpush1.msra.mxu0 0.0
    %1961 = vmatprep.subr.mxu0 0.0
    %1962 = vmatpush1.msra.mxu0 0.0
    %1963 = vmatprep.subr.mxu0 0.0
    %1964 = vmatpush1.msra.mxu0 0.0
    %1965 = vmatprep.subr.mxu0 0.0
    %1966 = vmatpush1.msra.mxu0 0.0
    %1967 = vmatprep.mubr.f32.mxu0 0.0
    %1968 = vmatmul.mubr.f32.gmra.mrb[0].mxu0 %v1805
    %v1969 = vpop.f32.mrb[0].mxu0
    %v1970 = vadd.f32 0.0, %v1969
    %v1971 = vpop.f32.mrb[0].mxu0
    %1972 = vdwg.mxu0
    %v1973 = vadd.f32 %v1902, %v1970
    %v1974 = vxor.u32 %v1973, 2147483648
    %v1975 = vmul.f32 %v1974, 1.442695
    %v1976 = vpow.pop %v1975
    %v1977 = vadd.f32 %v1976, 1.0
    %v1978 = vrcp.pop %v1977
    %v1979 = vmul.f32 1.0, %v1978
    %v1980 = vtanh.pop %v1973
    %v1981 = vmul.f32 %v1979, %v1720
    %1983 = vrot.lane.b32.xlu0 %v1980, 32
    %v1984 = vpop.permute.xlu0 %1983
    %v1986 = vmul.f32 %v1979, %v1984
    %1988 = vrot.lane.b32.xlu0 %v1986, 32
    %v1989 = vpop.permute.xlu0 %1988
    %v1991 = vadd.f32 %v1981, %v1989
    %v1992 = vtanh.pop %v1991
    %1994 = vrot.lane.b32.xlu0 %v1992, 32
    %v1995 = vpop.permute.xlu0 %1994
    %v1997 = vmul.f32 %v1979, %v1995
    %1999 = vrot.lane.b32.xlu0 %v1901, 64
    %v2000 = vpop.permute.xlu0 %1999
    %v2001 = vsel %vm175, %v2000, 0
    %2003 = vmatprep.subr.mxu0 0.0
    %2004 = vmatpush1.msra.mxu0 %v267
    %2005 = vmatprep.subr.mxu0 0.0
    %2006 = vmatpush1.msra.mxu0 %v268
    %2007 = vmatprep.subr.mxu0 0.0
    %2008 = vmatpush1.msra.mxu0 %v269
    %2009 = vmatprep.subr.mxu0 0.0
    %2010 = vmatpush1.msra.mxu0 %v270
    %2011 = vmatprep.subr.mxu0 0.0
    %2012 = vmatpush1.msra.mxu0 0.0
    %2013 = vmatprep.subr.mxu0 0.0
    %2014 = vmatpush1.msra.mxu0 0.0
    %2015 = vmatprep.subr.mxu0 0.0
    %2016 = vmatpush1.msra.mxu0 0.0
    %2017 = vmatprep.subr.mxu0 0.0
    %2018 = vmatpush1.msra.mxu0 0.0
    %2019 = vmatprep.subr.mxu0 0.0
    %2020 = vmatpush1.msra.mxu0 0.0
    %2021 = vmatprep.subr.mxu0 0.0
    %2022 = vmatpush1.msra.mxu0 0.0
    %2023 = vmatprep.subr.mxu0 0.0
    %2024 = vmatpush1.msra.mxu0 0.0
    %2025 = vmatprep.subr.mxu0 0.0
    %2026 = vmatpush1.msra.mxu0 0.0
    %2027 = vmatprep.subr.mxu0 0.0
    %2028 = vmatpush1.msra.mxu0 0.0
    %2029 = vmatprep.subr.mxu0 0.0
    %2030 = vmatpush1.msra.mxu0 0.0
    %2031 = vmatprep.subr.mxu0 0.0
    %2032 = vmatpush1.msra.mxu0 0.0
    %2033 = vmatprep.subr.mxu0 0.0
    %2034 = vmatpush1.msra.mxu0 0.0
    %2035 = vmatprep.subr.mxu0 0.0
    %2036 = vmatpush1.msra.mxu0 0.0
    %2037 = vmatprep.subr.mxu0 0.0
    %2038 = vmatpush1.msra.mxu0 0.0
    %2039 = vmatprep.subr.mxu0 0.0
    %2040 = vmatpush1.msra.mxu0 0.0
    %2041 = vmatprep.subr.mxu0 0.0
    %2042 = vmatpush1.msra.mxu0 0.0
    %2043 = vmatprep.subr.mxu0 0.0
    %2044 = vmatpush1.msra.mxu0 0.0
    %2045 = vmatprep.subr.mxu0 0.0
    %2046 = vmatpush1.msra.mxu0 0.0
    %2047 = vmatprep.subr.mxu0 0.0
    %2048 = vmatpush1.msra.mxu0 0.0
    %2049 = vmatprep.subr.mxu0 0.0
    %2050 = vmatpush1.msra.mxu0 0.0
    %2051 = vmatprep.subr.mxu0 0.0
    %2052 = vmatpush1.msra.mxu0 0.0
    %2053 = vmatprep.subr.mxu0 0.0
    %2054 = vmatpush1.msra.mxu0 0.0
    %2055 = vmatprep.subr.mxu0 0.0
    %2056 = vmatpush1.msra.mxu0 0.0
    %2057 = vmatprep.subr.mxu0 0.0
    %2058 = vmatpush1.msra.mxu0 0.0
    %2059 = vmatprep.subr.mxu0 0.0
    %2060 = vmatpush1.msra.mxu0 0.0
    %2061 = vmatprep.subr.mxu0 0.0
    %2062 = vmatpush1.msra.mxu0 0.0
    %2063 = vmatprep.subr.mxu0 0.0
    %2064 = vmatpush1.msra.mxu0 0.0
    %2065 = vmatprep.subr.mxu0 0.0
    %2066 = vmatpush1.msra.mxu0 0.0
    %2067 = vmatprep.mubr.f32.mxu0 0.0
    %2068 = vmatmul.mubr.f32.gmra.mrb[0].mxu0 %v2001
    %v2069 = vpop.f32.mrb[0].mxu0
    %v2070 = vadd.f32 0.0, %v2069
    %v2071 = vpop.f32.mrb[0].mxu0
    %2072 = vdwg.mxu0
    %2074 = vrot.lane.b32.xlu0 %v1997, 64
    %v2075 = vpop.permute.xlu0 %2074
    %v2076 = vsel %vm175, %v2075, 0
    %2078 = vmatprep.subr.mxu0 0.0
    %2079 = vmatpush1.msra.mxu0 %v263
    %2080 = vmatprep.subr.mxu0 0.0
    %2081 = vmatpush1.msra.mxu0 %v264
    %2082 = vmatprep.subr.mxu0 0.0
    %2083 = vmatpush1.msra.mxu0 %v265
    %2084 = vmatprep.subr.mxu0 0.0
    %2085 = vmatpush1.msra.mxu0 %v266
    %2086 = vmatprep.subr.mxu0 0.0
    %2087 = vmatpush1.msra.mxu0 0.0
    %2088 = vmatprep.subr.mxu0 0.0
    %2089 = vmatpush1.msra.mxu0 0.0
    %2090 = vmatprep.subr.mxu0 0.0
    %2091 = vmatpush1.msra.mxu0 0.0
    %2092 = vmatprep.subr.mxu0 0.0
    %2093 = vmatpush1.msra.mxu0 0.0
    %2094 = vmatprep.subr.mxu0 0.0
    %2095 = vmatpush1.msra.mxu0 0.0
    %2096 = vmatprep.subr.mxu0 0.0
    %2097 = vmatpush1.msra.mxu0 0.0
    %2098 = vmatprep.subr.mxu0 0.0
    %2099 = vmatpush1.msra.mxu0 0.0
    %2100 = vmatprep.subr.mxu0 0.0
    %2101 = vmatpush1.msra.mxu0 0.0
    %2102 = vmatprep.subr.mxu0 0.0
    %2103 = vmatpush1.msra.mxu0 0.0
    %2104 = vmatprep.subr.mxu0 0.0
    %2105 = vmatpush1.msra.mxu0 0.0
    %2106 = vmatprep.subr.mxu0 0.0
    %2107 = vmatpush1.msra.mxu0 0.0
    %2108 = vmatprep.subr.mxu0 0.0
    %2109 = vmatpush1.msra.mxu0 0.0
    %2110 = vmatprep.subr.mxu0 0.0
    %2111 = vmatpush1.msra.mxu0 0.0
    %2112 = vmatprep.subr.mxu0 0.0
    %2113 = vmatpush1.msra.mxu0 0.0
    %2114 = vmatprep.subr.mxu0 0.0
    %2115 = vmatpush1.msra.mxu0 0.0
    %2116 = vmatprep.subr.mxu0 0.0
    %2117 = vmatpush1.msra.mxu0 0.0
    %2118 = vmatprep.subr.mxu0 0.0
    %2119 = vmatpush1.msra.mxu0 0.0
    %2120 = vmatprep.subr.mxu0 0.0
    %2121 = vmatpush1.msra.mxu0 0.0
    %2122 = vmatprep.subr.mxu0 0.0
    %2123 = vmatpush1.msra.mxu0 0.0
    %2124 = vmatprep.subr.mxu0 0.0
    %2125 = vmatpush1.msra.mxu0 0.0
    %2126 = vmatprep.subr.mxu0 0.0
    %2127 = vmatpush1.msra.mxu0 0.0
    %2128 = vmatprep.subr.mxu0 0.0
    %2129 = vmatpush1.msra.mxu0 0.0
    %2130 = vmatprep.subr.mxu0 0.0
    %2131 = vmatpush1.msra.mxu0 0.0
    %2132 = vmatprep.subr.mxu0 0.0
    %2133 = vmatpush1.msra.mxu0 0.0
    %2134 = vmatprep.subr.mxu0 0.0
    %2135 = vmatpush1.msra.mxu0 0.0
    %2136 = vmatprep.subr.mxu0 0.0
    %2137 = vmatpush1.msra.mxu0 0.0
    %2138 = vmatprep.subr.mxu0 0.0
    %2139 = vmatpush1.msra.mxu0 0.0
    %2140 = vmatprep.subr.mxu0 0.0
    %2141 = vmatpush1.msra.mxu0 0.0
    %2142 = vmatprep.mubr.f32.mxu0 0.0
    %2143 = vmatmul.mubr.f32.gmra.mrb[0].mxu0 %v2076
    %v2144 = vpop.f32.mrb[0].mxu0
    %v2145 = vadd.f32 %v2070, %v2144
    %v2146 = vpop.f32.mrb[0].mxu0
    %2147 = vdwg.mxu0
    %v2148 = vadd.f32 %v2145, %v276
    %v2149 = vxor.u32 %v2148, 2147483648
    %v2150 = vmul.f32 %v2149, 1.442695
    %v2151 = vpow.pop %v2150
    %v2152 = vadd.f32 %v2151, 1.0
    %v2153 = vrcp.pop %v2152
    %v2154 = vmul.f32 1.0, %v2153
    %v2155 = vtanh.pop %v2148
    %v2156 = vmul.f32 %v2154, %v1895
    %2158 = vrot.lane.b32.xlu0 %v2155, 32
    %v2159 = vpop.permute.xlu0 %2158
    %v2161 = vmul.f32 %v2154, %v2159
    %2163 = vrot.lane.b32.xlu0 %v2161, 32
    %v2164 = vpop.permute.xlu0 %2163
    %v2166 = vadd.f32 %v2156, %v2164
    %v2167 = vtanh.pop %v2166
    %2169 = vrot.lane.b32.xlu0 %v2167, 32
    %v2170 = vpop.permute.xlu0 %2169
    %v2172 = vmul.f32 %v2154, %v2170
    %v2173 = vld [vmem:[#allocation2 + $0xe] sm:$0x3]
    %2174 = vmatprep.subr.mxu0 0.0
    %2175 = vmatpush1.msra.mxu0 %v259
    %2176 = vmatprep.subr.mxu0 0.0
    %2177 = vmatpush1.msra.mxu0 %v260
    %2178 = vmatprep.subr.mxu0 0.0
    %2179 = vmatpush1.msra.mxu0 %v261
    %2180 = vmatprep.subr.mxu0 0.0
    %2181 = vmatpush1.msra.mxu0 %v262
    %2182 = vmatprep.subr.mxu0 0.0
    %2183 = vmatpush1.msra.mxu0 0.0
    %2184 = vmatprep.subr.mxu0 0.0
    %2185 = vmatpush1.msra.mxu0 0.0
    %2186 = vmatprep.subr.mxu0 0.0
    %2187 = vmatpush1.msra.mxu0 0.0
    %2188 = vmatprep.subr.mxu0 0.0
    %2189 = vmatpush1.msra.mxu0 0.0
    %2190 = vmatprep.subr.mxu0 0.0
    %2191 = vmatpush1.msra.mxu0 0.0
    %2192 = vmatprep.subr.mxu0 0.0
    %2193 = vmatpush1.msra.mxu0 0.0
    %2194 = vmatprep.subr.mxu0 0.0
    %2195 = vmatpush1.msra.mxu0 0.0
    %2196 = vmatprep.subr.mxu0 0.0
    %2197 = vmatpush1.msra.mxu0 0.0
    %2198 = vmatprep.subr.mxu0 0.0
    %2199 = vmatpush1.msra.mxu0 0.0
    %2200 = vmatprep.subr.mxu0 0.0
    %2201 = vmatpush1.msra.mxu0 0.0
    %2202 = vmatprep.subr.mxu0 0.0
    %2203 = vmatpush1.msra.mxu0 0.0
    %2204 = vmatprep.subr.mxu0 0.0
    %2205 = vmatpush1.msra.mxu0 0.0
    %2206 = vmatprep.subr.mxu0 0.0
    %2207 = vmatpush1.msra.mxu0 0.0
    %2208 = vmatprep.subr.mxu0 0.0
    %2209 = vmatpush1.msra.mxu0 0.0
    %2210 = vmatprep.subr.mxu0 0.0
    %2211 = vmatpush1.msra.mxu0 0.0
    %2212 = vmatprep.subr.mxu0 0.0
    %2213 = vmatpush1.msra.mxu0 0.0
    %2214 = vmatprep.subr.mxu0 0.0
    %2215 = vmatpush1.msra.mxu0 0.0
    %2216 = vmatprep.subr.mxu0 0.0
    %2217 = vmatpush1.msra.mxu0 0.0
    %2218 = vmatprep.subr.mxu0 0.0
    %2219 = vmatpush1.msra.mxu0 0.0
    %2220 = vmatprep.subr.mxu0 0.0
    %2221 = vmatpush1.msra.mxu0 0.0
    %2222 = vmatprep.subr.mxu0 0.0
    %2223 = vmatpush1.msra.mxu0 0.0
    %2224 = vmatprep.subr.mxu0 0.0
    %2225 = vmatpush1.msra.mxu0 0.0
    %2226 = vmatprep.subr.mxu0 0.0
    %2227 = vmatpush1.msra.mxu0 0.0
    %2228 = vmatprep.subr.mxu0 0.0
    %2229 = vmatpush1.msra.mxu0 0.0
    %2230 = vmatprep.subr.mxu0 0.0
    %2231 = vmatpush1.msra.mxu0 0.0
    %2232 = vmatprep.subr.mxu0 0.0
    %2233 = vmatpush1.msra.mxu0 0.0
    %2234 = vmatprep.subr.mxu0 0.0
    %2235 = vmatpush1.msra.mxu0 0.0
    %2236 = vmatprep.subr.mxu0 0.0
    %2237 = vmatpush1.msra.mxu0 0.0
    %2238 = vmatprep.mubr.f32.mxu0 0.0
    %2239 = vmatmul.mubr.f32.gmra.mrb[0].mxu0 %v2076
    %v2240 = vpop.f32.mrb[0].mxu0
    %v2241 = vadd.f32 0.0, %v2240
    %v2242 = vpop.f32.mrb[0].mxu0
    %2243 = vdwg.mxu0
    %v2244 = vadd.f32 %v2173, %v2241
    %v2245 = vxor.u32 %v2244, 2147483648
    %v2246 = vmul.f32 %v2245, 1.442695
    %v2247 = vpow.pop %v2246
    %v2248 = vadd.f32 %v2247, 1.0
    %v2249 = vrcp.pop %v2248
    %v2250 = vmul.f32 1.0, %v2249
    %v2251 = vtanh.pop %v2244
    %v2252 = vmul.f32 %v2250, %v1991
    %2254 = vrot.lane.b32.xlu0 %v2251, 32
    %v2255 = vpop.permute.xlu0 %2254
    %v2257 = vmul.f32 %v2250, %v2255
    %2259 = vrot.lane.b32.xlu0 %v2257, 32
    %v2260 = vpop.permute.xlu0 %2259
    %v2262 = vadd.f32 %v2252, %v2260
    %v2263 = vtanh.pop %v2262
    %2265 = vrot.lane.b32.xlu0 %v2263, 32
    %v2266 = vpop.permute.xlu0 %2265
    %v2268 = vmul.f32 %v2250, %v2266
    %2270 = vrot.lane.b32.xlu0 %v2172, 64
    %v2271 = vpop.permute.xlu0 %2270
    %v2272 = vsel %vm175, %v2271, 0
    %2274 = vmatprep.subr.mxu0 0.0
    %2275 = vmatpush1.msra.mxu0 %v267
    %2276 = vmatprep.subr.mxu0 0.0
    %2277 = vmatpush1.msra.mxu0 %v268
    %2278 = vmatprep.subr.mxu0 0.0
    %2279 = vmatpush1.msra.mxu0 %v269
    %2280 = vmatprep.subr.mxu0 0.0
    %2281 = vmatpush1.msra.mxu0 %v270
    %2282 = vmatprep.subr.mxu0 0.0
    %2283 = vmatpush1.msra.mxu0 0.0
    %2284 = vmatprep.subr.mxu0 0.0
    %2285 = vmatpush1.msra.mxu0 0.0
    %2286 = vmatprep.subr.mxu0 0.0
    %2287 = vmatpush1.msra.mxu0 0.0
    %2288 = vmatprep.subr.mxu0 0.0
    %2289 = vmatpush1.msra.mxu0 0.0
    %2290 = vmatprep.subr.mxu0 0.0
    %2291 = vmatpush1.msra.mxu0 0.0
    %2292 = vmatprep.subr.mxu0 0.0
    %2293 = vmatpush1.msra.mxu0 0.0
    %2294 = vmatprep.subr.mxu0 0.0
    %2295 = vmatpush1.msra.mxu0 0.0
    %2296 = vmatprep.subr.mxu0 0.0
    %2297 = vmatpush1.msra.mxu0 0.0
    %2298 = vmatprep.subr.mxu0 0.0
    %2299 = vmatpush1.msra.mxu0 0.0
    %2300 = vmatprep.subr.mxu0 0.0
    %2301 = vmatpush1.msra.mxu0 0.0
    %2302 = vmatprep.subr.mxu0 0.0
    %2303 = vmatpush1.msra.mxu0 0.0
    %2304 = vmatprep.subr.mxu0 0.0
    %2305 = vmatpush1.msra.mxu0 0.0
    %2306 = vmatprep.subr.mxu0 0.0
    %2307 = vmatpush1.msra.mxu0 0.0
    %2308 = vmatprep.subr.mxu0 0.0
    %2309 = vmatpush1.msra.mxu0 0.0
    %2310 = vmatprep.subr.mxu0 0.0
    %2311 = vmatpush1.msra.mxu0 0.0
    %2312 = vmatprep.subr.mxu0 0.0
    %2313 = vmatpush1.msra.mxu0 0.0
    %2314 = vmatprep.subr.mxu0 0.0
    %2315 = vmatpush1.msra.mxu0 0.0
    %2316 = vmatprep.subr.mxu0 0.0
    %2317 = vmatpush1.msra.mxu0 0.0
    %2318 = vmatprep.subr.mxu0 0.0
    %2319 = vmatpush1.msra.mxu0 0.0
    %2320 = vmatprep.subr.mxu0 0.0
    %2321 = vmatpush1.msra.mxu0 0.0
    %2322 = vmatprep.subr.mxu0 0.0
    %2323 = vmatpush1.msra.mxu0 0.0
    %2324 = vmatprep.subr.mxu0 0.0
    %2325 = vmatpush1.msra.mxu0 0.0
    %2326 = vmatprep.subr.mxu0 0.0
    %2327 = vmatpush1.msra.mxu0 0.0
    %2328 = vmatprep.subr.mxu0 0.0
    %2329 = vmatpush1.msra.mxu0 0.0
    %2330 = vmatprep.subr.mxu0 0.0
    %2331 = vmatpush1.msra.mxu0 0.0
    %2332 = vmatprep.subr.mxu0 0.0
    %2333 = vmatpush1.msra.mxu0 0.0
    %2334 = vmatprep.subr.mxu0 0.0
    %2335 = vmatpush1.msra.mxu0 0.0
    %2336 = vmatprep.subr.mxu0 0.0
    %2337 = vmatpush1.msra.mxu0 0.0
    %2338 = vmatprep.mubr.f32.mxu0 0.0
    %2339 = vmatmul.mubr.f32.gmra.mrb[0].mxu0 %v2272
    %v2340 = vpop.f32.mrb[0].mxu0
    %v2341 = vadd.f32 0.0, %v2340
    %v2342 = vpop.f32.mrb[0].mxu0
    %2343 = vdwg.mxu0
    %2345 = vrot.lane.b32.xlu0 %v2268, 64
    %v2346 = vpop.permute.xlu0 %2345
    %v2347 = vsel %vm175, %v2346, 0
    %2349 = vmatprep.subr.mxu0 0.0
    %2350 = vmatpush1.msra.mxu0 %v263
    %2351 = vmatprep.subr.mxu0 0.0
    %2352 = vmatpush1.msra.mxu0 %v264
    %2353 = vmatprep.subr.mxu0 0.0
    %2354 = vmatpush1.msra.mxu0 %v265
    %2355 = vmatprep.subr.mxu0 0.0
    %2356 = vmatpush1.msra.mxu0 %v266
    %2357 = vmatprep.subr.mxu0 0.0
    %2358 = vmatpush1.msra.mxu0 0.0
    %2359 = vmatprep.subr.mxu0 0.0
    %2360 = vmatpush1.msra.mxu0 0.0
    %2361 = vmatprep.subr.mxu0 0.0
    %2362 = vmatpush1.msra.mxu0 0.0
    %2363 = vmatprep.subr.mxu0 0.0
    %2364 = vmatpush1.msra.mxu0 0.0
    %2365 = vmatprep.subr.mxu0 0.0
    %2366 = vmatpush1.msra.mxu0 0.0
    %2367 = vmatprep.subr.mxu0 0.0
    %2368 = vmatpush1.msra.mxu0 0.0
    %2369 = vmatprep.subr.mxu0 0.0
    %2370 = vmatpush1.msra.mxu0 0.0
    %2371 = vmatprep.subr.mxu0 0.0
    %2372 = vmatpush1.msra.mxu0 0.0
    %2373 = vmatprep.subr.mxu0 0.0
    %2374 = vmatpush1.msra.mxu0 0.0
    %2375 = vmatprep.subr.mxu0 0.0
    %2376 = vmatpush1.msra.mxu0 0.0
    %2377 = vmatprep.subr.mxu0 0.0
    %2378 = vmatpush1.msra.mxu0 0.0
    %2379 = vmatprep.subr.mxu0 0.0
    %2380 = vmatpush1.msra.mxu0 0.0
    %2381 = vmatprep.subr.mxu0 0.0
    %2382 = vmatpush1.msra.mxu0 0.0
    %2383 = vmatprep.subr.mxu0 0.0
    %2384 = vmatpush1.msra.mxu0 0.0
    %2385 = vmatprep.subr.mxu0 0.0
    %2386 = vmatpush1.msra.mxu0 0.0
    %2387 = vmatprep.subr.mxu0 0.0
    %2388 = vmatpush1.msra.mxu0 0.0
    %2389 = vmatprep.subr.mxu0 0.0
    %2390 = vmatpush1.msra.mxu0 0.0
    %2391 = vmatprep.subr.mxu0 0.0
    %2392 = vmatpush1.msra.mxu0 0.0
    %2393 = vmatprep.subr.mxu0 0.0
    %2394 = vmatpush1.msra.mxu0 0.0
    %2395 = vmatprep.subr.mxu0 0.0
    %2396 = vmatpush1.msra.mxu0 0.0
    %2397 = vmatprep.subr.mxu0 0.0
    %2398 = vmatpush1.msra.mxu0 0.0
    %2399 = vmatprep.subr.mxu0 0.0
    %2400 = vmatpush1.msra.mxu0 0.0
    %2401 = vmatprep.subr.mxu0 0.0
    %2402 = vmatpush1.msra.mxu0 0.0
    %2403 = vmatprep.subr.mxu0 0.0
    %2404 = vmatpush1.msra.mxu0 0.0
    %2405 = vmatprep.subr.mxu0 0.0
    %2406 = vmatpush1.msra.mxu0 0.0
    %2407 = vmatprep.subr.mxu0 0.0
    %2408 = vmatpush1.msra.mxu0 0.0
    %2409 = vmatprep.subr.mxu0 0.0
    %2410 = vmatpush1.msra.mxu0 0.0
    %2411 = vmatprep.subr.mxu0 0.0
    %2412 = vmatpush1.msra.mxu0 0.0
    %2413 = vmatprep.mubr.f32.mxu0 0.0
    %2414 = vmatmul.mubr.f32.gmra.mrb[0].mxu0 %v2347
    %v2415 = vpop.f32.mrb[0].mxu0
    %v2416 = vadd.f32 %v2341, %v2415
    %v2417 = vpop.f32.mrb[0].mxu0
    %2418 = vdwg.mxu0
    %v2419 = vadd.f32 %v2416, %v276
    %v2420 = vxor.u32 %v2419, 2147483648
    %v2421 = vmul.f32 %v2420, 1.442695
    %v2422 = vpow.pop %v2421
    %v2423 = vadd.f32 %v2422, 1.0
    %v2424 = vrcp.pop %v2423
    %v2425 = vmul.f32 1.0, %v2424
    %v2426 = vtanh.pop %v2419
    %v2427 = vmul.f32 %v2425, %v2166
    %2429 = vrot.lane.b32.xlu0 %v2426, 32
    %v2430 = vpop.permute.xlu0 %2429
    %v2432 = vmul.f32 %v2425, %v2430
    %2434 = vrot.lane.b32.xlu0 %v2432, 32
    %v2435 = vpop.permute.xlu0 %2434
    %v2437 = vadd.f32 %v2427, %v2435
    %v2438 = vtanh.pop %v2437
    %2440 = vrot.lane.b32.xlu0 %v2438, 32
    %v2441 = vpop.permute.xlu0 %2440
    %v2443 = vmul.f32 %v2425, %v2441
    %v2444 = vld [vmem:[%s8] sm:$0xff]
    %v2445 = vld [vmem:[%s8 + $0x8] sm:$0xff]
    %v2446 = vld [vmem:[%s8 + $0x10] sm:$0xff]
    %v2447 = vld [vmem:[%s8 + $0x18] sm:$0xff]
    %v2448 = vld [vmem:[%s9] sm:$0x1]
    %v2450 = vlaneseq
    %v2451 = vshrl.u32 %v2450, 7
    %v2452 = vsub.s32 0, %v2451
    %v2453 = vrot.slane %v2448, %v2452
    %2456 = vrot.lane.b32.xlu0 %v2443, 64
    %v2457 = vpop.permute.xlu0 %2456
    %v2458 = vsel %vm175, %v2457, 0
    %2460 = vmatprep.subr.mxu0 0.0
    %2461 = vmatpush1.msra.mxu0 %v2444
    %2462 = vmatprep.subr.mxu0 0.0
    %2463 = vmatpush1.msra.mxu0 %v2445
    %2464 = vmatprep.subr.mxu0 0.0
    %2465 = vmatpush1.msra.mxu0 %v2446
    %2466 = vmatprep.subr.mxu0 0.0
    %2467 = vmatpush1.msra.mxu0 %v2447
    %2468 = vmatprep.subr.mxu0 0.0
    %2469 = vmatpush1.msra.mxu0 0.0
    %2470 = vmatprep.subr.mxu0 0.0
    %2471 = vmatpush1.msra.mxu0 0.0
    %2472 = vmatprep.subr.mxu0 0.0
    %2473 = vmatpush1.msra.mxu0 0.0
    %2474 = vmatprep.subr.mxu0 0.0
    %2475 = vmatpush1.msra.mxu0 0.0
    %2476 = vmatprep.subr.mxu0 0.0
    %2477 = vmatpush1.msra.mxu0 0.0
    %2478 = vmatprep.subr.mxu0 0.0
    %2479 = vmatpush1.msra.mxu0 0.0
    %2480 = vmatprep.subr.mxu0 0.0
    %2481 = vmatpush1.msra.mxu0 0.0
    %2482 = vmatprep.subr.mxu0 0.0
    %2483 = vmatpush1.msra.mxu0 0.0
    %2484 = vmatprep.subr.mxu0 0.0
    %2485 = vmatpush1.msra.mxu0 0.0
    %2486 = vmatprep.subr.mxu0 0.0
    %2487 = vmatpush1.msra.mxu0 0.0
    %2488 = vmatprep.subr.mxu0 0.0
    %2489 = vmatpush1.msra.mxu0 0.0
    %2490 = vmatprep.subr.mxu0 0.0
    %2491 = vmatpush1.msra.mxu0 0.0
    %2492 = vmatprep.subr.mxu0 0.0
    %2493 = vmatpush1.msra.mxu0 0.0
    %2494 = vmatprep.subr.mxu0 0.0
    %2495 = vmatpush1.msra.mxu0 0.0
    %2496 = vmatprep.subr.mxu0 0.0
    %2497 = vmatpush1.msra.mxu0 0.0
    %2498 = vmatprep.subr.mxu0 0.0
    %2499 = vmatpush1.msra.mxu0 0.0
    %2500 = vmatprep.subr.mxu0 0.0
    %2501 = vmatpush1.msra.mxu0 0.0
    %2502 = vmatprep.subr.mxu0 0.0
    %2503 = vmatpush1.msra.mxu0 0.0
    %2504 = vmatprep.subr.mxu0 0.0
    %2505 = vmatpush1.msra.mxu0 0.0
    %2506 = vmatprep.subr.mxu0 0.0
    %2507 = vmatpush1.msra.mxu0 0.0
    %2508 = vmatprep.subr.mxu0 0.0
    %2509 = vmatpush1.msra.mxu0 0.0
    %2510 = vmatprep.subr.mxu0 0.0
    %2511 = vmatpush1.msra.mxu0 0.0
    %2512 = vmatprep.subr.mxu0 0.0
    %2513 = vmatpush1.msra.mxu0 0.0
    %2514 = vmatprep.subr.mxu0 0.0
    %2515 = vmatpush1.msra.mxu0 0.0
    %2516 = vmatprep.subr.mxu0 0.0
    %2517 = vmatpush1.msra.mxu0 0.0
    %2518 = vmatprep.subr.mxu0 0.0
    %2519 = vmatpush1.msra.mxu0 0.0
    %2520 = vmatprep.subr.mxu0 0.0
    %2521 = vmatpush1.msra.mxu0 0.0
    %2522 = vmatprep.subr.mxu0 0.0
    %2523 = vmatpush1.msra.mxu0 0.0
    %2524 = vmatprep.mubr.f32.mxu0 0.0
    %2525 = vmatmul.mubr.f32.gmra.mrb[0].mxu0 %v2458
    %v2526 = vpop.f32.mrb[0].mxu0
    %v2527 = vadd.f32 %v2453, %v2526
    %v2528 = vpop.f32.mrb[0].mxu0
    %2529 = vdwg.mxu0
    %vm2530 = vcmask 58368
    %2531 = vst.msk [vmem:[#allocation6] sm:$0x3] %vm2530, %v2527
    // Predicated region
    $region46: #{tpu_custom_call.1} parent=1 // pred_check
      _
    $region47: #{tpu_custom_call.1} parent=1 // pred_check_branch
      %2533 = sbr.rel (0) target = $region49
    $region48: #{tpu_custom_call.1} parent=1 // pred_region
      %s2535 = ssub.s32 32, 32
      %2536 = vsyncadd [#allocation5], %s2535
      %s2538 = sshll.u32 [#allocation6], 4
      %s2539 = int_to_ptr.vmem [resolvable:$true] %s2538
      %2541 = dma.vmem_to_hbm [thread:$0]  %s2539, 32, %s10, [#allocation5]
    $region49: #{tpu_custom_call.1} parent=1 // pred_fallthru
      _
    // Predicated region
    $region50: #{tpu_custom_call.1} parent=1 // pred_check
      _
    $region51: #{tpu_custom_call.1} parent=1 // pred_check_branch
      %2543 = sbr.rel (0) target = $region53
    $region52: #{tpu_custom_call.1} parent=1 // pred_region
      %2544 = dma.done [#allocation5], 32
    $region53: #{tpu_custom_call.1} parent=1 // pred_fallthru
      _
    %2545 = vsyncpa [#allocation4], 1
    %2546 = vsyncpa [#allocation5], 1

</llo_original>
